<compile_context>
chip_gen: v7x
topology: tpu7x:2x2x1
jax: 0.10.0
libtpu: 0.0.40
codegen_flags: <defaults>
</compile_context>

<pallas_src>
import functools

import numpy as np
import jax
import jax.numpy as jnp
from jax.experimental import pallas as pl
from jax.experimental.pallas import tpu as pltpu


def _attention_kernel(q_ref, k_ref, v_ref,
                      wq_ref, wk_ref, wv_ref, wo_ref,
                      bq_ref, bk_ref, bv_ref, bo_ref,
                      out_ref, *, num_heads, head_dim):
    f32 = jnp.float32
    bt, tq, e = q_ref.shape
    _, tk, _ = k_ref.shape
    cdt = q_ref.dtype                      # MXU operand dtype (bf16 stays bf16)

    # ---- fused in-projections (LoRA + scaling already folded into wq/bq) ----
    def project(x_ref, w_ref, b_ref, t):
        x2 = x_ref[...].reshape(bt * t, e)                                 # [bt*T, E]
        y = jnp.dot(x2, w_ref[...], preferred_element_type=f32) + b_ref[...]
        return y.astype(cdt).reshape(bt, t, e)

    q = project(q_ref, wq_ref, bq_ref, tq)                                 # [bt, Tq, E]
    k = project(k_ref, wk_ref, bk_ref, tk)                                 # [bt, Tk, E]
    v = project(v_ref, wv_ref, bv_ref, tk)                                 # [bt, Tk, E]

    wo = wo_ref[...].astype(cdt)                                           # [E, E]
    y = jnp.zeros((bt * tq, e), dtype=f32)

    # TODO(synk): attn_mask (masked_fill -inf), need_weights and need_metric paths
    # not implemented; the default call path uses attn_mask=None / False flags.
    for h in range(num_heads):
        sl = slice(h * head_dim, (h + 1) * head_dim)
        qh, kh, vh = q[..., sl], k[..., sl], v[..., sl]                    # [bt, T, Dh]
        # scores: contract head dims directly (no explicit kh.T transpose)
        s = jnp.einsum("bqd,bkd->bqk", qh, kh,
                       preferred_element_type=f32)                         # [bt, Tq, Tk]
        s = s - jnp.max(s, axis=-1, keepdims=True)
        p = jnp.exp(s)
        p = p * pl.reciprocal(jnp.sum(p, axis=-1, keepdims=True), approx=True)
        ctx = jnp.einsum("bqk,bkd->bqd", p.astype(cdt), vh,
                         preferred_element_type=f32)                       # [bt, Tq, Dh]
        # Fuse the output projection into the head loop: accumulate
        # ctx @ W_out[head rows], avoiding the [T, E] lane-axis concatenate.
        y = y + jnp.dot(ctx.astype(cdt).reshape(bt * tq, head_dim), wo[sl, :],
                        preferred_element_type=f32)

    out = (y + bo_ref[...]).reshape(bt, tq, e)
    out_ref[...] = out.astype(out_ref.dtype)


def _pick_batch_block(B, Tq, Tk, E):
    """Largest divisor of B with a modest per-step activation footprint and M<=1024."""
    best = 1
    for bt in range(1, B + 1):
        if B % bt:
            continue
        act_bytes = 4 * bt * ((2 * Tq + 2 * Tk) * E + Tq * Tk)
        if act_bytes <= (8 << 20) and bt * Tq <= 1024:
            best = bt
    return best


def attention_forward(q, k, v, params, num_heads,
                      attn_mask=None, need_weights=False, need_metric=False,
                      batch_block=None):
    """Pallas equivalent of Attention.forward(q, k, v). Returns (x, None, None)."""
    assert attn_mask is None  # TODO(synk): masked_fill(-inf) mask path not implemented.
    B, Tq, E = q.shape
    Bk, Tk, _ = k.shape
    Bv, Tv, _ = v.shape
    assert B == Bk == Bv, "Batch size of q, k, v must be the same"
    assert Tk == Tv
    head_dim = E // num_heads
    scaling = float(head_dim) ** (-0.5)

    W = params["in_proj_weight"]       # (3E, E)
    bias = params["in_proj_bias"]      # (3E,)
    A = params["TVPt_LoRA_a"]          # (r, E)
    LB = params["TVPt_LoRA_b"]         # (3E, r)

    # Fold the rank-r LoRA update and the softmax scaling into the projection
    # weights/biases (one small E x E x r GEMM per projection, outside the kernel):
    #   x @ (W_slice.T + A.T @ LB_slice.T)  ==  F.linear(x, W_slice) + LoRA delta
    def eff(w_rows, lb_rows):
        return w_rows.T + A.T @ lb_rows.T          # (E, E)

    cdt = q.dtype
    wq = (eff(W[:E], LB[:E]) * scaling).astype(cdt)
    wk = eff(W[E:2 * E], LB[E:2 * E]).astype(cdt)
    wv = eff(W[2 * E:], LB[2 * E:]).astype(cdt)
    wo = params["out_proj_weight"].T.astype(cdt)   # (E, E)
    bq = (bias[:E] * scaling).reshape(1, E).astype(jnp.float32)
    bk = bias[E:2 * E].reshape(1, E).astype(jnp.float32)
    bv = bias[2 * E:].reshape(1, E).astype(jnp.float32)
    bo = params["out_proj_bias"].reshape(1, E).astype(jnp.float32)

    bt = batch_block if batch_block is not None else _pick_batch_block(B, Tq, Tk, E)
    assert B % bt == 0

    kernel = functools.partial(_attention_kernel, num_heads=num_heads,
                               head_dim=head_dim)

    q_spec = pl.BlockSpec((bt, Tq, E), lambda b: (b, 0, 0))
    kv_spec = pl.BlockSpec((bt, Tk, E), lambda b: (b, 0, 0))
    w_spec = pl.BlockSpec((E, E), lambda b: (0, 0))
    b_spec = pl.BlockSpec((1, E), lambda b: (0, 0))

    x = pl.pallas_call(
        kernel,
        out_shape=jax.ShapeDtypeStruct((B, Tq, E), q.dtype),
        grid=(B // bt,),
        in_specs=[q_spec, kv_spec, kv_spec,
                  w_spec, w_spec, w_spec, w_spec,
                  b_spec, b_spec, b_spec, b_spec],
        out_specs=q_spec,
        compiler_params=pltpu.CompilerParams(
            dimension_semantics=("parallel",),
            vmem_limit_bytes=64 * 1024 * 1024),
    )(q, k, v, wq, wk, wv, wo, bq, bk, bv, bo)

    metric = None  # need_metric=False path
    return x, metric, None


def reference_forward(q, k, v, params, num_heads):
    """Plain-JAX reference mirroring the PyTorch forward (separate LoRA path)."""
    B, T, E = q.shape
    Dh = E // num_heads
    scaling = float(Dh) ** (-0.5)
    W, bias = params["in_proj_weight"], params["in_proj_bias"]
    A, LB = params["TVPt_LoRA_a"], params["TVPt_LoRA_b"]

    def lin(x, w, b=None):
        y = jnp.einsum("bte,oe->bto", x, w)
        return y + b if b is not None else y

    def split_heads(x):  # [B,T,E] -> [B,H,T,Dh]
        return x.reshape(B, T, num_heads, Dh).transpose(0, 2, 1, 3)

    q_ = split_heads(lin(q, W[:E], bias[:E]) + lin(lin(q, A), LB[:E]))
    k_ = split_heads(lin(k, W[E:2 * E], bias[E:2 * E]) + lin(lin(k, A), LB[E:2 * E]))
    v_ = split_heads(lin(v, W[2 * E:], bias[2 * E:]) + lin(lin(v, A), LB[2 * E:]))
    q_ = q_ * scaling
    attn = jnp.einsum("bhtd,bhsd->bhts", q_, k_)
    attn = jax.nn.softmax(attn, axis=-1)
    x = jnp.einsum("bhts,bhsd->bhtd", attn, v_).transpose(0, 2, 1, 3).reshape(B, T, E)
    x = lin(x, params["out_proj_weight"], params["out_proj_bias"])
    return x


if __name__ == "__main__":
    B, T, E, H, R = 2, 8, 32, 4, 4  # batch, seq, embed_dim, num_heads, lora_dim

    key = jax.random.PRNGKey(0)
    ks = jax.random.split(key, 9)
    # Deterministic synthetic parameters (nonzero so every term is exercised).
    params = {
        "in_proj_weight": jax.random.normal(ks[0], (3 * E, E), jnp.float32) * 0.05,
        "in_proj_bias":   jax.random.normal(ks[1], (3 * E,), jnp.float32) * 0.01,
        "out_proj_weight": jax.random.normal(ks[2], (E, E), jnp.float32) * 0.05,
        "out_proj_bias":   jax.random.normal(ks[3], (E,), jnp.float32) * 0.01,
        "TVPt_LoRA_a":     jax.random.normal(ks[4], (R, E), jnp.float32) * 0.1,
        "TVPt_LoRA_b":     jax.random.normal(ks[5], (3 * E, R), jnp.float32) * 0.1,
    }

    q = jax.random.normal(ks[6], (B, T, E), jnp.float32)
    k = jax.random.normal(ks[7], (B, T, E), jnp.float32)
    v = jax.random.normal(ks[8], (B, T, E), jnp.float32)

    out, metric, attn_w = attention_forward(q, k, v, params, num_heads=H)
    out = jax.block_until_ready(out)

    ref = jax.block_until_ready(reference_forward(q, k, v, params, num_heads=H))
    assert out.shape == (B, T, E)
    # Tolerance loosened vs pure-f32: the softmax uses the EUP approximate
    # reciprocal and weight folding changes the f32 accumulation order.
    assert np.allclose(np.asarray(out), np.asarray(ref), atol=5e-3, rtol=5e-3), \
        "Pallas kernel mismatch vs reference"

    print("KERNEL_OK")
</pallas_src>

<mosaic_0001>
module attributes {stable_mosaic.version = 11 : i64} {
  func.func @_attention_kernel(%arg0: i32, %arg1: memref<2x8x32xf32, #tpu.memory_space<vmem>>, %arg2: memref<2x8x32xf32, #tpu.memory_space<vmem>>, %arg3: memref<2x8x32xf32, #tpu.memory_space<vmem>>, %arg4: memref<32x32xf32, #tpu.memory_space<vmem>>, %arg5: memref<32x32xf32, #tpu.memory_space<vmem>>, %arg6: memref<32x32xf32, #tpu.memory_space<vmem>>, %arg7: memref<32x32xf32, #tpu.memory_space<vmem>>, %arg8: memref<1x32xf32, #tpu.memory_space<vmem>>, %arg9: memref<1x32xf32, #tpu.memory_space<vmem>>, %arg10: memref<1x32xf32, #tpu.memory_space<vmem>>, %arg11: memref<1x32xf32, #tpu.memory_space<vmem>>, %arg12: memref<2x8x32xf32, #tpu.memory_space<vmem>>) attributes {dimension_semantics = [#tpu.dimension_semantics<parallel>], iteration_bounds = array<i64: 1>, scalar_prefetch = 0 : i64, scratch_operands = 0 : i64, tpu.core_type = #tpu.core_type<tc>, window_params = [{transform_indices = @transform_0, window_bounds = array<i64: 2, 8, 32>}, {transform_indices = @transform_1, window_bounds = array<i64: 2, 8, 32>}, {transform_indices = @transform_2, window_bounds = array<i64: 2, 8, 32>}, {pipeline_mode = #tpu.pipeline_mode<synchronous>, transform_indices = @transform_3, window_bounds = array<i64: 32, 32>}, {pipeline_mode = #tpu.pipeline_mode<synchronous>, transform_indices = @transform_4, window_bounds = array<i64: 32, 32>}, {pipeline_mode = #tpu.pipeline_mode<synchronous>, transform_indices = @transform_5, window_bounds = array<i64: 32, 32>}, {pipeline_mode = #tpu.pipeline_mode<synchronous>, transform_indices = @transform_6, window_bounds = array<i64: 32, 32>}, {pipeline_mode = #tpu.pipeline_mode<synchronous>, transform_indices = @transform_7, window_bounds = array<i64: 1, 32>}, {pipeline_mode = #tpu.pipeline_mode<synchronous>, transform_indices = @transform_8, window_bounds = array<i64: 1, 32>}, {pipeline_mode = #tpu.pipeline_mode<synchronous>, transform_indices = @transform_9, window_bounds = array<i64: 1, 32>}, {pipeline_mode = #tpu.pipeline_mode<synchronous>, transform_indices = @transform_10, window_bounds = array<i64: 1, 32>}, {transform_indices = @transform_11, window_bounds = array<i64: 2, 8, 32>}]} {
    %c0 = arith.constant 0 : index
    %c0_0 = arith.constant 0 : index
    %c0_1 = arith.constant 0 : index
    %0 = vector.load %arg1[%c0, %c0_0, %c0_1] : memref<2x8x32xf32, #tpu.memory_space<vmem>>, vector<2x8x32xf32>
    %1 = vector.shape_cast %0 : vector<2x8x32xf32> to vector<16x32xf32>
    %c0_2 = arith.constant 0 : index
    %c0_3 = arith.constant 0 : index
    %2 = vector.load %arg4[%c0_2, %c0_3] : memref<32x32xf32, #tpu.memory_space<vmem>>, vector<32x32xf32>
    %cst = arith.constant dense<0.000000e+00> : vector<16x32xf32>
    %3 = tpu.matmul %1, %2, %cst {dimension_numbers = #tpu.dot_dimension_numbers<[1], [0], [0], [1], [0, 0, 1, 1], [], []>} : vector<16x32xf32>, vector<32x32xf32>, vector<16x32xf32> -> vector<16x32xf32>
    %c0_4 = arith.constant 0 : index
    %c0_5 = arith.constant 0 : index
    %4 = vector.load %arg8[%c0_4, %c0_5] : memref<1x32xf32, #tpu.memory_space<vmem>>, vector<1x32xf32>
    %5 = vector.broadcast %4 : vector<1x32xf32> to vector<16x32xf32>
    %6 = arith.addf %3, %5 : vector<16x32xf32>
    %7 = vector.shape_cast %6 : vector<16x32xf32> to vector<2x8x32xf32>
    %c0_6 = arith.constant 0 : index
    %c0_7 = arith.constant 0 : index
    %c0_8 = arith.constant 0 : index
    %8 = vector.load %arg2[%c0_6, %c0_7, %c0_8] : memref<2x8x32xf32, #tpu.memory_space<vmem>>, vector<2x8x32xf32>
    %9 = vector.shape_cast %8 : vector<2x8x32xf32> to vector<16x32xf32>
    %c0_9 = arith.constant 0 : index
    %c0_10 = arith.constant 0 : index
    %10 = vector.load %arg5[%c0_9, %c0_10] : memref<32x32xf32, #tpu.memory_space<vmem>>, vector<32x32xf32>
    %cst_11 = arith.constant dense<0.000000e+00> : vector<16x32xf32>
    %11 = tpu.matmul %9, %10, %cst_11 {dimension_numbers = #tpu.dot_dimension_numbers<[1], [0], [0], [1], [0, 0, 1, 1], [], []>} : vector<16x32xf32>, vector<32x32xf32>, vector<16x32xf32> -> vector<16x32xf32>
    %c0_12 = arith.constant 0 : index
    %c0_13 = arith.constant 0 : index
    %12 = vector.load %arg9[%c0_12, %c0_13] : memref<1x32xf32, #tpu.memory_space<vmem>>, vector<1x32xf32>
    %13 = vector.broadcast %12 : vector<1x32xf32> to vector<16x32xf32>
    %14 = arith.addf %11, %13 : vector<16x32xf32>
    %15 = vector.shape_cast %14 : vector<16x32xf32> to vector<2x8x32xf32>
    %c0_14 = arith.constant 0 : index
    %c0_15 = arith.constant 0 : index
    %c0_16 = arith.constant 0 : index
    %16 = vector.load %arg3[%c0_14, %c0_15, %c0_16] : memref<2x8x32xf32, #tpu.memory_space<vmem>>, vector<2x8x32xf32>
    %17 = vector.shape_cast %16 : vector<2x8x32xf32> to vector<16x32xf32>
    %c0_17 = arith.constant 0 : index
    %c0_18 = arith.constant 0 : index
    %18 = vector.load %arg6[%c0_17, %c0_18] : memref<32x32xf32, #tpu.memory_space<vmem>>, vector<32x32xf32>
    %cst_19 = arith.constant dense<0.000000e+00> : vector<16x32xf32>
    %19 = tpu.matmul %17, %18, %cst_19 {dimension_numbers = #tpu.dot_dimension_numbers<[1], [0], [0], [1], [0, 0, 1, 1], [], []>} : vector<16x32xf32>, vector<32x32xf32>, vector<16x32xf32> -> vector<16x32xf32>
    %c0_20 = arith.constant 0 : index
    %c0_21 = arith.constant 0 : index
    %20 = vector.load %arg10[%c0_20, %c0_21] : memref<1x32xf32, #tpu.memory_space<vmem>>, vector<1x32xf32>
    %21 = vector.broadcast %20 : vector<1x32xf32> to vector<16x32xf32>
    %22 = arith.addf %19, %21 : vector<16x32xf32>
    %23 = vector.shape_cast %22 : vector<16x32xf32> to vector<2x8x32xf32>
    %c0_22 = arith.constant 0 : index
    %c0_23 = arith.constant 0 : index
    %24 = vector.load %arg7[%c0_22, %c0_23] : memref<32x32xf32, #tpu.memory_space<vmem>>, vector<32x32xf32>
    %cst_24 = arith.constant 0.000000e+00 : f32
    %25 = vector.broadcast %cst_24 : f32 to vector<16x32xf32>
    %26 = vector.extract_strided_slice %7 {offsets = [0, 0, 0], sizes = [2, 8, 8], strides = [1, 1, 1]} : vector<2x8x32xf32> to vector<2x8x8xf32>
    %27 = vector.extract_strided_slice %15 {offsets = [0, 0, 0], sizes = [2, 8, 8], strides = [1, 1, 1]} : vector<2x8x32xf32> to vector<2x8x8xf32>
    %28 = vector.extract_strided_slice %23 {offsets = [0, 0, 0], sizes = [2, 8, 8], strides = [1, 1, 1]} : vector<2x8x32xf32> to vector<2x8x8xf32>
    "tpu.trace_start"() <{level = 10 : i32, message = "bqd,bkd->bqk"}> : () -> ()
    %cst_25 = arith.constant dense<0.000000e+00> : vector<2x8x8xf32>
    %29 = tpu.matmul %26, %27, %cst_25 {dimension_numbers = #tpu.dot_dimension_numbers<[2], [2], [1], [1], [0, 0, 0, 1, 1, 1], [0], [0]>} : vector<2x8x8xf32>, vector<2x8x8xf32>, vector<2x8x8xf32> -> vector<2x8x8xf32>
    "tpu.trace_stop"() : () -> ()
    %cst_26 = arith.constant dense<0xFF800000> : vector<2x8xf32>
    %30 = vector.multi_reduction <maximumf>, %29, %cst_26 [2] : vector<2x8x8xf32> to vector<2x8xf32>
    %31 = vector.shape_cast %30 : vector<2x8xf32> to vector<2x8x1xf32>
    %32 = vector.broadcast %31 : vector<2x8x1xf32> to vector<2x8x8xf32>
    %33 = arith.subf %29, %32 : vector<2x8x8xf32>
    %34 = math.exp %33 : vector<2x8x8xf32>
    %cst_27 = arith.constant dense<0.000000e+00> : vector<2x8xf32>
    %35 = vector.multi_reduction <add>, %34, %cst_27 [2] : vector<2x8x8xf32> to vector<2x8xf32>
    %36 = vector.shape_cast %35 : vector<2x8xf32> to vector<2x8x1xf32>
    %37 = tpu.reciprocal %36 {approx = true} : vector<2x8x1xf32> -> vector<2x8x1xf32>
    %38 = vector.broadcast %37 : vector<2x8x1xf32> to vector<2x8x8xf32>
    %39 = arith.mulf %34, %38 : vector<2x8x8xf32>
    "tpu.trace_start"() <{level = 10 : i32, message = "bqk,bkd->bqd"}> : () -> ()
    %cst_28 = arith.constant dense<0.000000e+00> : vector<2x8x8xf32>
    %40 = tpu.matmul %39, %28, %cst_28 {dimension_numbers = #tpu.dot_dimension_numbers<[2], [1], [1], [2], [0, 0, 0, 1, 1, 2], [0], [0]>} : vector<2x8x8xf32>, vector<2x8x8xf32>, vector<2x8x8xf32> -> vector<2x8x8xf32>
    "tpu.trace_stop"() : () -> ()
    %41 = vector.shape_cast %40 : vector<2x8x8xf32> to vector<16x8xf32>
    %42 = vector.extract_strided_slice %24 {offsets = [0, 0], sizes = [8, 32], strides = [1, 1]} : vector<32x32xf32> to vector<8x32xf32>
    %cst_29 = arith.constant dense<0.000000e+00> : vector<16x32xf32>
    %43 = tpu.matmul %41, %42, %cst_29 {dimension_numbers = #tpu.dot_dimension_numbers<[1], [0], [0], [1], [0, 0, 1, 1], [], []>} : vector<16x8xf32>, vector<8x32xf32>, vector<16x32xf32> -> vector<16x32xf32>
    %44 = arith.addf %25, %43 : vector<16x32xf32>
    %45 = vector.extract_strided_slice %7 {offsets = [0, 0, 8], sizes = [2, 8, 8], strides = [1, 1, 1]} : vector<2x8x32xf32> to vector<2x8x8xf32>
    %46 = vector.extract_strided_slice %15 {offsets = [0, 0, 8], sizes = [2, 8, 8], strides = [1, 1, 1]} : vector<2x8x32xf32> to vector<2x8x8xf32>
    %47 = vector.extract_strided_slice %23 {offsets = [0, 0, 8], sizes = [2, 8, 8], strides = [1, 1, 1]} : vector<2x8x32xf32> to vector<2x8x8xf32>
    "tpu.trace_start"() <{level = 10 : i32, message = "bqd,bkd->bqk"}> : () -> ()
    %cst_30 = arith.constant dense<0.000000e+00> : vector<2x8x8xf32>
    %48 = tpu.matmul %45, %46, %cst_30 {dimension_numbers = #tpu.dot_dimension_numbers<[2], [2], [1], [1], [0, 0, 0, 1, 1, 1], [0], [0]>} : vector<2x8x8xf32>, vector<2x8x8xf32>, vector<2x8x8xf32> -> vector<2x8x8xf32>
    "tpu.trace_stop"() : () -> ()
    %cst_31 = arith.constant dense<0xFF800000> : vector<2x8xf32>
    %49 = vector.multi_reduction <maximumf>, %48, %cst_31 [2] : vector<2x8x8xf32> to vector<2x8xf32>
    %50 = vector.shape_cast %49 : vector<2x8xf32> to vector<2x8x1xf32>
    %51 = vector.broadcast %50 : vector<2x8x1xf32> to vector<2x8x8xf32>
    %52 = arith.subf %48, %51 : vector<2x8x8xf32>
    %53 = math.exp %52 : vector<2x8x8xf32>
    %cst_32 = arith.constant dense<0.000000e+00> : vector<2x8xf32>
    %54 = vector.multi_reduction <add>, %53, %cst_32 [2] : vector<2x8x8xf32> to vector<2x8xf32>
    %55 = vector.shape_cast %54 : vector<2x8xf32> to vector<2x8x1xf32>
    %56 = tpu.reciprocal %55 {approx = true} : vector<2x8x1xf32> -> vector<2x8x1xf32>
    %57 = vector.broadcast %56 : vector<2x8x1xf32> to vector<2x8x8xf32>
    %58 = arith.mulf %53, %57 : vector<2x8x8xf32>
    "tpu.trace_start"() <{level = 10 : i32, message = "bqk,bkd->bqd"}> : () -> ()
    %cst_33 = arith.constant dense<0.000000e+00> : vector<2x8x8xf32>
    %59 = tpu.matmul %58, %47, %cst_33 {dimension_numbers = #tpu.dot_dimension_numbers<[2], [1], [1], [2], [0, 0, 0, 1, 1, 2], [0], [0]>} : vector<2x8x8xf32>, vector<2x8x8xf32>, vector<2x8x8xf32> -> vector<2x8x8xf32>
    "tpu.trace_stop"() : () -> ()
    %60 = vector.shape_cast %59 : vector<2x8x8xf32> to vector<16x8xf32>
    %61 = vector.extract_strided_slice %24 {offsets = [8, 0], sizes = [8, 32], strides = [1, 1]} : vector<32x32xf32> to vector<8x32xf32>
    %cst_34 = arith.constant dense<0.000000e+00> : vector<16x32xf32>
    %62 = tpu.matmul %60, %61, %cst_34 {dimension_numbers = #tpu.dot_dimension_numbers<[1], [0], [0], [1], [0, 0, 1, 1], [], []>} : vector<16x8xf32>, vector<8x32xf32>, vector<16x32xf32> -> vector<16x32xf32>
    %63 = arith.addf %44, %62 : vector<16x32xf32>
    %64 = vector.extract_strided_slice %7 {offsets = [0, 0, 16], sizes = [2, 8, 8], strides = [1, 1, 1]} : vector<2x8x32xf32> to vector<2x8x8xf32>
    %65 = vector.extract_strided_slice %15 {offsets = [0, 0, 16], sizes = [2, 8, 8], strides = [1, 1, 1]} : vector<2x8x32xf32> to vector<2x8x8xf32>
    %66 = vector.extract_strided_slice %23 {offsets = [0, 0, 16], sizes = [2, 8, 8], strides = [1, 1, 1]} : vector<2x8x32xf32> to vector<2x8x8xf32>
    "tpu.trace_start"() <{level = 10 : i32, message = "bqd,bkd->bqk"}> : () -> ()
    %cst_35 = arith.constant dense<0.000000e+00> : vector<2x8x8xf32>
    %67 = tpu.matmul %64, %65, %cst_35 {dimension_numbers = #tpu.dot_dimension_numbers<[2], [2], [1], [1], [0, 0, 0, 1, 1, 1], [0], [0]>} : vector<2x8x8xf32>, vector<2x8x8xf32>, vector<2x8x8xf32> -> vector<2x8x8xf32>
    "tpu.trace_stop"() : () -> ()
    %cst_36 = arith.constant dense<0xFF800000> : vector<2x8xf32>
    %68 = vector.multi_reduction <maximumf>, %67, %cst_36 [2] : vector<2x8x8xf32> to vector<2x8xf32>
    %69 = vector.shape_cast %68 : vector<2x8xf32> to vector<2x8x1xf32>
    %70 = vector.broadcast %69 : vector<2x8x1xf32> to vector<2x8x8xf32>
    %71 = arith.subf %67, %70 : vector<2x8x8xf32>
    %72 = math.exp %71 : vector<2x8x8xf32>
    %cst_37 = arith.constant dense<0.000000e+00> : vector<2x8xf32>
    %73 = vector.multi_reduction <add>, %72, %cst_37 [2] : vector<2x8x8xf32> to vector<2x8xf32>
    %74 = vector.shape_cast %73 : vector<2x8xf32> to vector<2x8x1xf32>
    %75 = tpu.reciprocal %74 {approx = true} : vector<2x8x1xf32> -> vector<2x8x1xf32>
    %76 = vector.broadcast %75 : vector<2x8x1xf32> to vector<2x8x8xf32>
    %77 = arith.mulf %72, %76 : vector<2x8x8xf32>
    "tpu.trace_start"() <{level = 10 : i32, message = "bqk,bkd->bqd"}> : () -> ()
    %cst_38 = arith.constant dense<0.000000e+00> : vector<2x8x8xf32>
    %78 = tpu.matmul %77, %66, %cst_38 {dimension_numbers = #tpu.dot_dimension_numbers<[2], [1], [1], [2], [0, 0, 0, 1, 1, 2], [0], [0]>} : vector<2x8x8xf32>, vector<2x8x8xf32>, vector<2x8x8xf32> -> vector<2x8x8xf32>
    "tpu.trace_stop"() : () -> ()
    %79 = vector.shape_cast %78 : vector<2x8x8xf32> to vector<16x8xf32>
    %80 = vector.extract_strided_slice %24 {offsets = [16, 0], sizes = [8, 32], strides = [1, 1]} : vector<32x32xf32> to vector<8x32xf32>
    %cst_39 = arith.constant dense<0.000000e+00> : vector<16x32xf32>
    %81 = tpu.matmul %79, %80, %cst_39 {dimension_numbers = #tpu.dot_dimension_numbers<[1], [0], [0], [1], [0, 0, 1, 1], [], []>} : vector<16x8xf32>, vector<8x32xf32>, vector<16x32xf32> -> vector<16x32xf32>
    %82 = arith.addf %63, %81 : vector<16x32xf32>
    %83 = vector.extract_strided_slice %7 {offsets = [0, 0, 24], sizes = [2, 8, 8], strides = [1, 1, 1]} : vector<2x8x32xf32> to vector<2x8x8xf32>
    %84 = vector.extract_strided_slice %15 {offsets = [0, 0, 24], sizes = [2, 8, 8], strides = [1, 1, 1]} : vector<2x8x32xf32> to vector<2x8x8xf32>
    %85 = vector.extract_strided_slice %23 {offsets = [0, 0, 24], sizes = [2, 8, 8], strides = [1, 1, 1]} : vector<2x8x32xf32> to vector<2x8x8xf32>
    "tpu.trace_start"() <{level = 10 : i32, message = "bqd,bkd->bqk"}> : () -> ()
    %cst_40 = arith.constant dense<0.000000e+00> : vector<2x8x8xf32>
    %86 = tpu.matmul %83, %84, %cst_40 {dimension_numbers = #tpu.dot_dimension_numbers<[2], [2], [1], [1], [0, 0, 0, 1, 1, 1], [0], [0]>} : vector<2x8x8xf32>, vector<2x8x8xf32>, vector<2x8x8xf32> -> vector<2x8x8xf32>
    "tpu.trace_stop"() : () -> ()
    %cst_41 = arith.constant dense<0xFF800000> : vector<2x8xf32>
    %87 = vector.multi_reduction <maximumf>, %86, %cst_41 [2] : vector<2x8x8xf32> to vector<2x8xf32>
    %88 = vector.shape_cast %87 : vector<2x8xf32> to vector<2x8x1xf32>
    %89 = vector.broadcast %88 : vector<2x8x1xf32> to vector<2x8x8xf32>
    %90 = arith.subf %86, %89 : vector<2x8x8xf32>
    %91 = math.exp %90 : vector<2x8x8xf32>
    %cst_42 = arith.constant dense<0.000000e+00> : vector<2x8xf32>
    %92 = vector.multi_reduction <add>, %91, %cst_42 [2] : vector<2x8x8xf32> to vector<2x8xf32>
    %93 = vector.shape_cast %92 : vector<2x8xf32> to vector<2x8x1xf32>
    %94 = tpu.reciprocal %93 {approx = true} : vector<2x8x1xf32> -> vector<2x8x1xf32>
    %95 = vector.broadcast %94 : vector<2x8x1xf32> to vector<2x8x8xf32>
    %96 = arith.mulf %91, %95 : vector<2x8x8xf32>
    "tpu.trace_start"() <{level = 10 : i32, message = "bqk,bkd->bqd"}> : () -> ()
    %cst_43 = arith.constant dense<0.000000e+00> : vector<2x8x8xf32>
    %97 = tpu.matmul %96, %85, %cst_43 {dimension_numbers = #tpu.dot_dimension_numbers<[2], [1], [1], [2], [0, 0, 0, 1, 1, 2], [0], [0]>} : vector<2x8x8xf32>, vector<2x8x8xf32>, vector<2x8x8xf32> -> vector<2x8x8xf32>
    "tpu.trace_stop"() : () -> ()
    %98 = vector.shape_cast %97 : vector<2x8x8xf32> to vector<16x8xf32>
    %99 = vector.extract_strided_slice %24 {offsets = [24, 0], sizes = [8, 32], strides = [1, 1]} : vector<32x32xf32> to vector<8x32xf32>
    %cst_44 = arith.constant dense<0.000000e+00> : vector<16x32xf32>
    %100 = tpu.matmul %98, %99, %cst_44 {dimension_numbers = #tpu.dot_dimension_numbers<[1], [0], [0], [1], [0, 0, 1, 1], [], []>} : vector<16x8xf32>, vector<8x32xf32>, vector<16x32xf32> -> vector<16x32xf32>
    %101 = arith.addf %82, %100 : vector<16x32xf32>
    %c0_45 = arith.constant 0 : index
    %c0_46 = arith.constant 0 : index
    %102 = vector.load %arg11[%c0_45, %c0_46] : memref<1x32xf32, #tpu.memory_space<vmem>>, vector<1x32xf32>
    %103 = vector.broadcast %102 : vector<1x32xf32> to vector<16x32xf32>
    %104 = arith.addf %101, %103 : vector<16x32xf32>
    %105 = vector.shape_cast %104 : vector<16x32xf32> to vector<2x8x32xf32>
    %c0_47 = arith.constant 0 : index
    %c0_48 = arith.constant 0 : index
    %c0_49 = arith.constant 0 : index
    %106 = vector.load %arg12[%c0_47, %c0_48, %c0_49] : memref<2x8x32xf32, #tpu.memory_space<vmem>>, vector<2x8x32xf32>
    tpu.vector_store %arg12[%c0_47, %c0_48, %c0_49], %105 {strides = array<i32>} : memref<2x8x32xf32, #tpu.memory_space<vmem>>, vector<2x8x32xf32>,
    return
  }
  func.func @transform_0(%arg0: i32) -> (i32, i32, i32) {
    %c0_i32 = arith.constant 0 : i32
    %c0_i32_0 = arith.constant 0 : i32
    %c0_i32_1 = arith.constant 0 : i32
    return %arg0, %c0_i32, %c0_i32_0 : i32, i32, i32
  }
  func.func @transform_1(%arg0: i32) -> (i32, i32, i32) {
    %c0_i32 = arith.constant 0 : i32
    %c0_i32_0 = arith.constant 0 : i32
    %c0_i32_1 = arith.constant 0 : i32
    return %arg0, %c0_i32, %c0_i32_0 : i32, i32, i32
  }
  func.func @transform_2(%arg0: i32) -> (i32, i32, i32) {
    %c0_i32 = arith.constant 0 : i32
    %c0_i32_0 = arith.constant 0 : i32
    %c0_i32_1 = arith.constant 0 : i32
    return %arg0, %c0_i32, %c0_i32_0 : i32, i32, i32
  }
  func.func @transform_3(%arg0: i32) -> (i32, i32) {
    %c0_i32 = arith.constant 0 : i32
    %c0_i32_0 = arith.constant 0 : i32
    %c0_i32_1 = arith.constant 0 : i32
    return %c0_i32, %c0_i32_0 : i32, i32
  }
  func.func @transform_4(%arg0: i32) -> (i32, i32) {
    %c0_i32 = arith.constant 0 : i32
    %c0_i32_0 = arith.constant 0 : i32
    %c0_i32_1 = arith.constant 0 : i32
    return %c0_i32, %c0_i32_0 : i32, i32
  }
  func.func @transform_5(%arg0: i32) -> (i32, i32) {
    %c0_i32 = arith.constant 0 : i32
    %c0_i32_0 = arith.constant 0 : i32
    %c0_i32_1 = arith.constant 0 : i32
    return %c0_i32, %c0_i32_0 : i32, i32
  }
  func.func @transform_6(%arg0: i32) -> (i32, i32) {
    %c0_i32 = arith.constant 0 : i32
    %c0_i32_0 = arith.constant 0 : i32
    %c0_i32_1 = arith.constant 0 : i32
    return %c0_i32, %c0_i32_0 : i32, i32
  }
  func.func @transform_7(%arg0: i32) -> (i32, i32) {
    %c0_i32 = arith.constant 0 : i32
    %c0_i32_0 = arith.constant 0 : i32
    %c0_i32_1 = arith.constant 0 : i32
    return %c0_i32, %c0_i32_0 : i32, i32
  }
  func.func @transform_8(%arg0: i32) -> (i32, i32) {
    %c0_i32 = arith.constant 0 : i32
    %c0_i32_0 = arith.constant 0 : i32
    %c0_i32_1 = arith.constant 0 : i32
    return %c0_i32, %c0_i32_0 : i32, i32
  }
  func.func @transform_9(%arg0: i32) -> (i32, i32) {
    %c0_i32 = arith.constant 0 : i32
    %c0_i32_0 = arith.constant 0 : i32
    %c0_i32_1 = arith.constant 0 : i32
    return %c0_i32, %c0_i32_0 : i32, i32
  }
  func.func @transform_10(%arg0: i32) -> (i32, i32) {
    %c0_i32 = arith.constant 0 : i32
    %c0_i32_0 = arith.constant 0 : i32
    %c0_i32_1 = arith.constant 0 : i32
    return %c0_i32, %c0_i32_0 : i32, i32
  }
  func.func @transform_11(%arg0: i32) -> (i32, i32, i32) {
    %c0_i32 = arith.constant 0 : i32
    %c0_i32_0 = arith.constant 0 : i32
    %c0_i32_1 = arith.constant 0 : i32
    return %arg0, %c0_i32, %c0_i32_0 : i32, i32, i32
  }
}

</mosaic_0001>

<llo_original>
// kernel: tpu_custom_call.1
$region0: #{tpu_custom_call.1}
  #allocation0 [shape = 'u32[]', space=smem, size = 0x4, offset = 0x4, fixed_abs, tag = 'smem constant byte address 0x4 - core index']
  #allocation1 [shape = 'u32[144,128]{1,0:T(1,128)}', space=vmem, size = 0x12000, scoped, tag = 'internal scratch']
  %s0 = inlined_call_operand.hbm [shape: f32[2,8,32], index: 0, kind: input, shape index: {}]
  %s1 = inlined_call_operand.hbm [shape: f32[2,8,32], index: 1, kind: input, shape index: {}]
  %s2 = inlined_call_operand.hbm [shape: f32[2,8,32], index: 2, kind: input, shape index: {}]
  %s3 = inlined_call_operand.hbm [shape: f32[32,32], index: 3, kind: input, shape index: {}]
  %s4 = inlined_call_operand.hbm [shape: f32[32,32], index: 4, kind: input, shape index: {}]
  %s5 = inlined_call_operand.hbm [shape: f32[32,32], index: 5, kind: input, shape index: {}]
  %s6 = inlined_call_operand.hbm [shape: f32[32,32], index: 6, kind: input, shape index: {}]
  %s7 = inlined_call_operand.hbm [shape: f32[1,32], index: 7, kind: input, shape index: {}]
  %s8 = inlined_call_operand.hbm [shape: f32[1,32], index: 8, kind: input, shape index: {}]
  %s9 = inlined_call_operand.hbm [shape: f32[1,32], index: 9, kind: input, shape index: {}]
  %s10 = inlined_call_operand.hbm [shape: f32[1,32], index: 10, kind: input, shape index: {}]
  %s11 = inlined_call_operand.hbm [shape: f32[2,8,32], index: 11, kind: output, shape index: {}]
  %s12 = sld [smem:[#allocation0]]
  $region98: #{tpu_custom_call.1} parent=0
    _
  %s14 = ssub.s32 1, %s12
  %s15 = scalar_select 0, %s14, %s12
  $region1: #{tpu_custom_call.1} parent=0
    #allocation2 [shape = 'u8[8192]{0}', space=vmem, size = 0x2000, scoped, tag = 'input window, operand 0, single buffered']
    #allocation3 [shape = 's32[1]{0}', space=sflag, size = 0x4, scoped, tag = 'scoped memory for tpu_custom_call.1']
    #allocation4 [shape = 's32[1]{0}', space=sflag, size = 0x4, scoped, tag = 'scoped memory for tpu_custom_call.1']
    #allocation5 [shape = 'u8[8192]{0}', space=vmem, size = 0x2000, scoped, tag = 'input window, operand 1, single buffered']
    #allocation6 [shape = 's32[1]{0}', space=sflag, size = 0x4, scoped, tag = 'scoped memory for tpu_custom_call.1']
    #allocation7 [shape = 'u8[8192]{0}', space=vmem, size = 0x2000, scoped, tag = 'input window, operand 2, single buffered']
    #allocation8 [shape = 'u8[16384]{0}', space=vmem, size = 0x4000, scoped, tag = 'input window, operand 3, single buffered']
    #allocation9 [shape = 's32[1]{0}', space=sflag, size = 0x4, scoped, tag = 'scoped memory for tpu_custom_call.1']
    #allocation10 [shape = 'u8[16384]{0}', space=vmem, size = 0x4000, scoped, tag = 'input window, operand 4, single buffered']
    #allocation11 [shape = 'u8[16384]{0}', space=vmem, size = 0x4000, scoped, tag = 'input window, operand 5, single buffered']
    #allocation12 [shape = 's32[1]{0}', space=sflag, size = 0x4, scoped, tag = 'scoped memory for tpu_custom_call.1']
    #allocation13 [shape = 'u8[16384]{0}', space=vmem, size = 0x4000, scoped, tag = 'input window, operand 6, single buffered']
    #allocation14 [shape = 'u8[512]{0}', space=vmem, size = 0x400, scoped, tag = 'input window, operand 7, single buffered']
    #allocation15 [shape = 's32[1]{0}', space=sflag, size = 0x4, scoped, tag = 'scoped memory for tpu_custom_call.1']
    #allocation16 [shape = 'u8[512]{0}', space=vmem, size = 0x400, scoped, tag = 'input window, operand 8, single buffered']
    #allocation17 [shape = 'u8[512]{0}', space=vmem, size = 0x400, scoped, tag = 'input window, operand 9, single buffered']
    #allocation18 [shape = 's32[1]{0}', space=sflag, size = 0x4, scoped, tag = 'scoped memory for tpu_custom_call.1']
    #allocation19 [shape = 'u8[512]{0}', space=vmem, size = 0x400, scoped, tag = 'input window, operand 10, single buffered']
    #allocation20 [shape = 'u8[8192]{0}', space=vmem, size = 0x2000, scoped, tag = 'output window, operand 0, single buffered']
    %16 = vsyncpa [#allocation3], 0
    %17 = vsyncpa [#allocation6], 0
    %18 = vsyncpa [#allocation9], 0
    %19 = vsyncpa [#allocation12], 0
    %20 = vsyncpa [#allocation15], 0
    %21 = vsyncpa [#allocation18], 0
    %22 = vsyncpa [#allocation4], 0
    // Predicated region
    $region2: #{tpu_custom_call.1} parent=1 // pred_check
      _
    $region3: #{tpu_custom_call.1} parent=1 // pred_check_branch
      %24 = sbr.rel (0) target = $region5
    $region4: #{tpu_custom_call.1} parent=1 // pred_region
      %s26 = ssub.s32 256, 256
      %27 = vsyncadd [#allocation3], %s26
      %s28 = sshll.u32 [#allocation2], 4
      %s29 = int_to_ptr.vmem [resolvable:$true] %s28
      %34 = dma.hbm_to_vmem [thread:$0]  %s0, 256, %s29, [#allocation3], 128, 128, 8
    $region5: #{tpu_custom_call.1} parent=1 // pred_fallthru
      _
    // Predicated region
    $region6: #{tpu_custom_call.1} parent=1 // pred_check
      _
    $region7: #{tpu_custom_call.1} parent=1 // pred_check_branch
      %36 = sbr.rel (0) target = $region9
    $region8: #{tpu_custom_call.1} parent=1 // pred_region
      %s38 = ssub.s32 256, 256
      %39 = vsyncadd [#allocation6], %s38
      %s40 = sshll.u32 [#allocation5], 4
      %s41 = int_to_ptr.vmem [resolvable:$true] %s40
      %46 = dma.hbm_to_vmem [thread:$0]  %s1, 256, %s41, [#allocation6], 128, 128, 8
    $region9: #{tpu_custom_call.1} parent=1 // pred_fallthru
      _
    // Predicated region
    $region10: #{tpu_custom_call.1} parent=1 // pred_check
      _
    $region11: #{tpu_custom_call.1} parent=1 // pred_check_branch
      %48 = sbr.rel (0) target = $region13
    $region12: #{tpu_custom_call.1} parent=1 // pred_region
      %s50 = ssub.s32 256, 256
      %51 = vsyncadd [#allocation6], %s50
      %s52 = sshll.u32 [#allocation7], 4
      %s53 = int_to_ptr.vmem [resolvable:$true] %s52
      %58 = dma.hbm_to_vmem [thread:$0]  %s2, 256, %s53, [#allocation6], 128, 128, 8
    $region13: #{tpu_custom_call.1} parent=1 // pred_fallthru
      _
    // Predicated region
    $region14: #{tpu_custom_call.1} parent=1 // pred_check
      _
    $region15: #{tpu_custom_call.1} parent=1 // pred_check_branch
      %60 = sbr.rel (0) target = $region17
    $region16: #{tpu_custom_call.1} parent=1 // pred_region
      %s62 = ssub.s32 512, 512
      %63 = vsyncadd [#allocation9], %s62
      %s64 = sshll.u32 [#allocation8], 4
      %s65 = int_to_ptr.vmem [resolvable:$true] %s64
      %70 = dma.hbm_to_vmem [thread:$0]  %s3, 512, %s65, [#allocation9], 128, 128, 8
    $region17: #{tpu_custom_call.1} parent=1 // pred_fallthru
      _
    // Predicated region
    $region18: #{tpu_custom_call.1} parent=1 // pred_check
      _
    $region19: #{tpu_custom_call.1} parent=1 // pred_check_branch
      %72 = sbr.rel (0) target = $region21
    $region20: #{tpu_custom_call.1} parent=1 // pred_region
      %s74 = ssub.s32 512, 512
      %75 = vsyncadd [#allocation9], %s74
      %s76 = sshll.u32 [#allocation10], 4
      %s77 = int_to_ptr.vmem [resolvable:$true] %s76
      %82 = dma.hbm_to_vmem [thread:$0]  %s4, 512, %s77, [#allocation9], 128, 128, 8
    $region21: #{tpu_custom_call.1} parent=1 // pred_fallthru
      _
    // Predicated region
    $region22: #{tpu_custom_call.1} parent=1 // pred_check
      _
    $region23: #{tpu_custom_call.1} parent=1 // pred_check_branch
      %84 = sbr.rel (0) target = $region25
    $region24: #{tpu_custom_call.1} parent=1 // pred_region
      %s86 = ssub.s32 512, 512
      %87 = vsyncadd [#allocation12], %s86
      %s88 = sshll.u32 [#allocation11], 4
      %s89 = int_to_ptr.vmem [resolvable:$true] %s88
      %94 = dma.hbm_to_vmem [thread:$0]  %s5, 512, %s89, [#allocation12], 128, 128, 8
    $region25: #{tpu_custom_call.1} parent=1 // pred_fallthru
      _
    // Predicated region
    $region26: #{tpu_custom_call.1} parent=1 // pred_check
      _
    $region27: #{tpu_custom_call.1} parent=1 // pred_check_branch
      %96 = sbr.rel (0) target = $region29
    $region28: #{tpu_custom_call.1} parent=1 // pred_region
      %s98 = ssub.s32 512, 512
      %99 = vsyncadd [#allocation12], %s98
      %s100 = sshll.u32 [#allocation13], 4
      %s101 = int_to_ptr.vmem [resolvable:$true] %s100
      %106 = dma.hbm_to_vmem [thread:$0]  %s6, 512, %s101, [#allocation12], 128, 128, 8
    $region29: #{tpu_custom_call.1} parent=1 // pred_fallthru
      _
    // Predicated region
    $region30: #{tpu_custom_call.1} parent=1 // pred_check
      _
    $region31: #{tpu_custom_call.1} parent=1 // pred_check_branch
      %108 = sbr.rel (0) target = $region33
    $region32: #{tpu_custom_call.1} parent=1 // pred_region
      %s110 = ssub.s32 16, 16
      %111 = vsyncadd [#allocation15], %s110
      %s113 = sshll.u32 [#allocation14], 4
      %s114 = int_to_ptr.vmem [resolvable:$true] %s113
      %116 = dma.hbm_to_vmem [thread:$0]  %s7, 16, %s114, [#allocation15]
    $region33: #{tpu_custom_call.1} parent=1 // pred_fallthru
      _
    // Predicated region
    $region34: #{tpu_custom_call.1} parent=1 // pred_check
      _
    $region35: #{tpu_custom_call.1} parent=1 // pred_check_branch
      %118 = sbr.rel (0) target = $region37
    $region36: #{tpu_custom_call.1} parent=1 // pred_region
      %s120 = ssub.s32 16, 16
      %121 = vsyncadd [#allocation15], %s120
      %s123 = sshll.u32 [#allocation16], 4
      %s124 = int_to_ptr.vmem [resolvable:$true] %s123
      %126 = dma.hbm_to_vmem [thread:$0]  %s8, 16, %s124, [#allocation15]
    $region37: #{tpu_custom_call.1} parent=1 // pred_fallthru
      _
    // Predicated region
    $region38: #{tpu_custom_call.1} parent=1 // pred_check
      _
    $region39: #{tpu_custom_call.1} parent=1 // pred_check_branch
      %128 = sbr.rel (0) target = $region41
    $region40: #{tpu_custom_call.1} parent=1 // pred_region
      %s130 = ssub.s32 16, 16
      %131 = vsyncadd [#allocation18], %s130
      %s133 = sshll.u32 [#allocation17], 4
      %s134 = int_to_ptr.vmem [resolvable:$true] %s133
      %136 = dma.hbm_to_vmem [thread:$0]  %s9, 16, %s134, [#allocation18]
    $region41: #{tpu_custom_call.1} parent=1 // pred_fallthru
      _
    // Predicated region
    $region42: #{tpu_custom_call.1} parent=1 // pred_check
      _
    $region43: #{tpu_custom_call.1} parent=1 // pred_check_branch
      %138 = sbr.rel (0) target = $region45
    $region44: #{tpu_custom_call.1} parent=1 // pred_region
      %s140 = ssub.s32 16, 16
      %141 = vsyncadd [#allocation18], %s140
      %s143 = sshll.u32 [#allocation19], 4
      %s144 = int_to_ptr.vmem [resolvable:$true] %s143
      %146 = dma.hbm_to_vmem [thread:$0]  %s10, 16, %s144, [#allocation18]
    $region45: #{tpu_custom_call.1} parent=1 // pred_fallthru
      _
    // Predicated region
    $region46: #{tpu_custom_call.1} parent=1 // pred_check
      _
    $region47: #{tpu_custom_call.1} parent=1 // pred_check_branch
      %148 = sbr.rel (0) target = $region49
    $region48: #{tpu_custom_call.1} parent=1 // pred_region
      %149 = dma.done [#allocation3], 256
    $region49: #{tpu_custom_call.1} parent=1 // pred_fallthru
      _
    // Predicated region
    $region50: #{tpu_custom_call.1} parent=1 // pred_check
      _
    $region51: #{tpu_custom_call.1} parent=1 // pred_check_branch
      %151 = sbr.rel (0) target = $region53
    $region52: #{tpu_custom_call.1} parent=1 // pred_region
      %152 = dma.done [#allocation6], 256
    $region53: #{tpu_custom_call.1} parent=1 // pred_fallthru
      _
    // Predicated region
    $region54: #{tpu_custom_call.1} parent=1 // pred_check
      _
    $region55: #{tpu_custom_call.1} parent=1 // pred_check_branch
      %154 = sbr.rel (0) target = $region57
    $region56: #{tpu_custom_call.1} parent=1 // pred_region
      %155 = dma.done [#allocation6], 256
    $region57: #{tpu_custom_call.1} parent=1 // pred_fallthru
      _
    // Predicated region
    $region58: #{tpu_custom_call.1} parent=1 // pred_check
      _
    $region59: #{tpu_custom_call.1} parent=1 // pred_check_branch
      %157 = sbr.rel (0) target = $region61
    $region60: #{tpu_custom_call.1} parent=1 // pred_region
      %158 = dma.done [#allocation9], 512
    $region61: #{tpu_custom_call.1} parent=1 // pred_fallthru
      _
    // Predicated region
    $region62: #{tpu_custom_call.1} parent=1 // pred_check
      _
    $region63: #{tpu_custom_call.1} parent=1 // pred_check_branch
      %160 = sbr.rel (0) target = $region65
    $region64: #{tpu_custom_call.1} parent=1 // pred_region
      %161 = dma.done [#allocation9], 512
    $region65: #{tpu_custom_call.1} parent=1 // pred_fallthru
      _
    // Predicated region
    $region66: #{tpu_custom_call.1} parent=1 // pred_check
      _
    $region67: #{tpu_custom_call.1} parent=1 // pred_check_branch
      %163 = sbr.rel (0) target = $region69
    $region68: #{tpu_custom_call.1} parent=1 // pred_region
      %164 = dma.done [#allocation12], 512
    $region69: #{tpu_custom_call.1} parent=1 // pred_fallthru
      _
    // Predicated region
    $region70: #{tpu_custom_call.1} parent=1 // pred_check
      _
    $region71: #{tpu_custom_call.1} parent=1 // pred_check_branch
      %166 = sbr.rel (0) target = $region73
    $region72: #{tpu_custom_call.1} parent=1 // pred_region
      %167 = dma.done [#allocation12], 512
    $region73: #{tpu_custom_call.1} parent=1 // pred_fallthru
      _
    // Predicated region
    $region74: #{tpu_custom_call.1} parent=1 // pred_check
      _
    $region75: #{tpu_custom_call.1} parent=1 // pred_check_branch
      %169 = sbr.rel (0) target = $region77
    $region76: #{tpu_custom_call.1} parent=1 // pred_region
      %170 = dma.done [#allocation15], 16
    $region77: #{tpu_custom_call.1} parent=1 // pred_fallthru
      _
    // Predicated region
    $region78: #{tpu_custom_call.1} parent=1 // pred_check
      _
    $region79: #{tpu_custom_call.1} parent=1 // pred_check_branch
      %172 = sbr.rel (0) target = $region81
    $region80: #{tpu_custom_call.1} parent=1 // pred_region
      %173 = dma.done [#allocation15], 16
    $region81: #{tpu_custom_call.1} parent=1 // pred_fallthru
      _
    // Predicated region
    $region82: #{tpu_custom_call.1} parent=1 // pred_check
      _
    $region83: #{tpu_custom_call.1} parent=1 // pred_check_branch
      %175 = sbr.rel (0) target = $region85
    $region84: #{tpu_custom_call.1} parent=1 // pred_region
      %176 = dma.done [#allocation18], 16
    $region85: #{tpu_custom_call.1} parent=1 // pred_fallthru
      _
    // Predicated region
    $region86: #{tpu_custom_call.1} parent=1 // pred_check
      _
    $region87: #{tpu_custom_call.1} parent=1 // pred_check_branch
      %178 = sbr.rel (0) target = $region89
    $region88: #{tpu_custom_call.1} parent=1 // pred_region
      %179 = dma.done [#allocation18], 16
    $region89: #{tpu_custom_call.1} parent=1 // pred_fallthru
      _
    %v180 = vld [vmem:[#allocation2] sm:$0xff]
    %v181 = vld [vmem:[#allocation2 + $0x8] sm:$0xff]
    %v182 = vld [vmem:[#allocation8] sm:$0xff]
    %v183 = vld [vmem:[#allocation8 + $0x8] sm:$0xff]
    %v184 = vld [vmem:[#allocation8 + $0x10] sm:$0xff]
    %v185 = vld [vmem:[#allocation8 + $0x18] sm:$0xff]
    %v186 = vld [vmem:[#allocation14] sm:$0x1]
    %v188 = vlaneseq
    %v189 = vshrl.u32 %v188, 7
    %v190 = vsub.s32 0, %v189
    %v191 = vrot.slane %v186, %v190
    %vm193 = vcmask 261120
    %v195 = vsel %vm193, %v180, 0
    %v198 = vsel %vm193, %v181, 0
    %200 = vmatprep.subr.mxu0 0.0
    %201 = vmatpush1.msra.mxu0 %v182
    %202 = vmatprep.subr.mxu0 0.0
    %203 = vmatpush1.msra.mxu0 %v183
    %204 = vmatprep.subr.mxu0 0.0
    %205 = vmatpush1.msra.mxu0 %v184
    %206 = vmatprep.subr.mxu0 0.0
    %207 = vmatpush1.msra.mxu0 %v185
    %208 = vmatprep.subr.mxu0 0.0
    %209 = vmatpush1.msra.mxu0 0.0
    %210 = vmatprep.subr.mxu0 0.0
    %211 = vmatpush1.msra.mxu0 0.0
    %212 = vmatprep.subr.mxu0 0.0
    %213 = vmatpush1.msra.mxu0 0.0
    %214 = vmatprep.subr.mxu0 0.0
    %215 = vmatpush1.msra.mxu0 0.0
    %216 = vmatprep.subr.mxu0 0.0
    %217 = vmatpush1.msra.mxu0 0.0
    %218 = vmatprep.subr.mxu0 0.0
    %219 = vmatpush1.msra.mxu0 0.0
    %220 = vmatprep.subr.mxu0 0.0
    %221 = vmatpush1.msra.mxu0 0.0
    %222 = vmatprep.subr.mxu0 0.0
    %223 = vmatpush1.msra.mxu0 0.0
    %224 = vmatprep.subr.mxu0 0.0
    %225 = vmatpush1.msra.mxu0 0.0
    %226 = vmatprep.subr.mxu0 0.0
    %227 = vmatpush1.msra.mxu0 0.0
    %228 = vmatprep.subr.mxu0 0.0
    %229 = vmatpush1.msra.mxu0 0.0
    %230 = vmatprep.subr.mxu0 0.0
    %231 = vmatpush1.msra.mxu0 0.0
    %232 = vmatprep.subr.mxu0 0.0
    %233 = vmatpush1.msra.mxu0 0.0
    %234 = vmatprep.subr.mxu0 0.0
    %235 = vmatpush1.msra.mxu0 0.0
    %236 = vmatprep.subr.mxu0 0.0
    %237 = vmatpush1.msra.mxu0 0.0
    %238 = vmatprep.subr.mxu0 0.0
    %239 = vmatpush1.msra.mxu0 0.0
    %240 = vmatprep.subr.mxu0 0.0
    %241 = vmatpush1.msra.mxu0 0.0
    %242 = vmatprep.subr.mxu0 0.0
    %243 = vmatpush1.msra.mxu0 0.0
    %244 = vmatprep.subr.mxu0 0.0
    %245 = vmatpush1.msra.mxu0 0.0
    %246 = vmatprep.subr.mxu0 0.0
    %247 = vmatpush1.msra.mxu0 0.0
    %248 = vmatprep.subr.mxu0 0.0
    %249 = vmatpush1.msra.mxu0 0.0
    %250 = vmatprep.subr.mxu0 0.0
    %251 = vmatpush1.msra.mxu0 0.0
    %252 = vmatprep.subr.mxu0 0.0
    %253 = vmatpush1.msra.mxu0 0.0
    %254 = vmatprep.subr.mxu0 0.0
    %255 = vmatpush1.msra.mxu0 0.0
    %256 = vmatprep.subr.mxu0 0.0
    %257 = vmatpush1.msra.mxu0 0.0
    %258 = vmatprep.subr.mxu0 0.0
    %259 = vmatpush1.msra.mxu0 0.0
    %260 = vmatprep.subr.mxu0 0.0
    %261 = vmatpush1.msra.mxu0 0.0
    %262 = vmatprep.subr.mxu0 0.0
    %263 = vmatpush1.msra.mxu0 0.0
    %264 = vmatprep.mubr.f32.mxu0 0.0
    %265 = vmatmul.mubr.f32.gmra.mrb[0].mxu0 %v195
    %v266 = vpop.f32.mrb[0].mxu0
    %v267 = vadd.f32 %v191, %v266
    %v268 = vpop.f32.mrb[0].mxu0
    %269 = vmatprep.mubr.f32.mxu0 0.0
    %270 = vmatmul.mubr.f32.gmra.mrb[0].mxu0 %v198
    %v271 = vpop.f32.mrb[0].mxu0
    %v272 = vadd.f32 %v191, %v271
    %v273 = vpop.f32.mrb[0].mxu0
    %274 = vdwg.mxu0
    %v275 = vld [vmem:[#allocation5] sm:$0xff]
    %v276 = vld [vmem:[#allocation5 + $0x8] sm:$0xff]
    %v277 = vld [vmem:[#allocation10] sm:$0xff]
    %v278 = vld [vmem:[#allocation10 + $0x8] sm:$0xff]
    %v279 = vld [vmem:[#allocation10 + $0x10] sm:$0xff]
    %v280 = vld [vmem:[#allocation10 + $0x18] sm:$0xff]
    %v281 = vld [vmem:[#allocation16] sm:$0x1]
    %v283 = vlaneseq
    %v284 = vshrl.u32 %v283, 7
    %v285 = vsub.s32 0, %v284
    %v286 = vrot.slane %v281, %v285
    %v289 = vsel %vm193, %v275, 0
    %v292 = vsel %vm193, %v276, 0
    %294 = vmatprep.subr.mxu0 0.0
    %295 = vmatpush1.msra.mxu0 %v277
    %296 = vmatprep.subr.mxu0 0.0
    %297 = vmatpush1.msra.mxu0 %v278
    %298 = vmatprep.subr.mxu0 0.0
    %299 = vmatpush1.msra.mxu0 %v279
    %300 = vmatprep.subr.mxu0 0.0
    %301 = vmatpush1.msra.mxu0 %v280
    %302 = vmatprep.subr.mxu0 0.0
    %303 = vmatpush1.msra.mxu0 0.0
    %304 = vmatprep.subr.mxu0 0.0
    %305 = vmatpush1.msra.mxu0 0.0
    %306 = vmatprep.subr.mxu0 0.0
    %307 = vmatpush1.msra.mxu0 0.0
    %308 = vmatprep.subr.mxu0 0.0
    %309 = vmatpush1.msra.mxu0 0.0
    %310 = vmatprep.subr.mxu0 0.0
    %311 = vmatpush1.msra.mxu0 0.0
    %312 = vmatprep.subr.mxu0 0.0
    %313 = vmatpush1.msra.mxu0 0.0
    %314 = vmatprep.subr.mxu0 0.0
    %315 = vmatpush1.msra.mxu0 0.0
    %316 = vmatprep.subr.mxu0 0.0
    %317 = vmatpush1.msra.mxu0 0.0
    %318 = vmatprep.subr.mxu0 0.0
    %319 = vmatpush1.msra.mxu0 0.0
    %320 = vmatprep.subr.mxu0 0.0
    %321 = vmatpush1.msra.mxu0 0.0
    %322 = vmatprep.subr.mxu0 0.0
    %323 = vmatpush1.msra.mxu0 0.0
    %324 = vmatprep.subr.mxu0 0.0
    %325 = vmatpush1.msra.mxu0 0.0
    %326 = vmatprep.subr.mxu0 0.0
    %327 = vmatpush1.msra.mxu0 0.0
    %328 = vmatprep.subr.mxu0 0.0
    %329 = vmatpush1.msra.mxu0 0.0
    %330 = vmatprep.subr.mxu0 0.0
    %331 = vmatpush1.msra.mxu0 0.0
    %332 = vmatprep.subr.mxu0 0.0
    %333 = vmatpush1.msra.mxu0 0.0
    %334 = vmatprep.subr.mxu0 0.0
    %335 = vmatpush1.msra.mxu0 0.0
    %336 = vmatprep.subr.mxu0 0.0
    %337 = vmatpush1.msra.mxu0 0.0
    %338 = vmatprep.subr.mxu0 0.0
    %339 = vmatpush1.msra.mxu0 0.0
    %340 = vmatprep.subr.mxu0 0.0
    %341 = vmatpush1.msra.mxu0 0.0
    %342 = vmatprep.subr.mxu0 0.0
    %343 = vmatpush1.msra.mxu0 0.0
    %344 = vmatprep.subr.mxu0 0.0
    %345 = vmatpush1.msra.mxu0 0.0
    %346 = vmatprep.subr.mxu0 0.0
    %347 = vmatpush1.msra.mxu0 0.0
    %348 = vmatprep.subr.mxu0 0.0
    %349 = vmatpush1.msra.mxu0 0.0
    %350 = vmatprep.subr.mxu0 0.0
    %351 = vmatpush1.msra.mxu0 0.0
    %352 = vmatprep.subr.mxu0 0.0
    %353 = vmatpush1.msra.mxu0 0.0
    %354 = vmatprep.subr.mxu0 0.0
    %355 = vmatpush1.msra.mxu0 0.0
    %356 = vmatprep.subr.mxu0 0.0
    %357 = vmatpush1.msra.mxu0 0.0
    %358 = vmatprep.mubr.f32.mxu0 0.0
    %359 = vmatmul.mubr.f32.gmra.mrb[0].mxu0 %v289
    %v360 = vpop.f32.mrb[0].mxu0
    %v361 = vadd.f32 %v286, %v360
    %v362 = vpop.f32.mrb[0].mxu0
    %363 = vmatprep.mubr.f32.mxu0 0.0
    %364 = vmatmul.mubr.f32.gmra.mrb[0].mxu0 %v292
    %v365 = vpop.f32.mrb[0].mxu0
    %v366 = vadd.f32 %v286, %v365
    %v367 = vpop.f32.mrb[0].mxu0
    %368 = vdwg.mxu0
    %v369 = vld [vmem:[#allocation7] sm:$0xff]
    %v370 = vld [vmem:[#allocation7 + $0x8] sm:$0xff]
    %v371 = vld [vmem:[#allocation11] sm:$0xff]
    %v372 = vld [vmem:[#allocation11 + $0x8] sm:$0xff]
    %v373 = vld [vmem:[#allocation11 + $0x10] sm:$0xff]
    %v374 = vld [vmem:[#allocation11 + $0x18] sm:$0xff]
    %v375 = vld [vmem:[#allocation17] sm:$0x1]
    %v377 = vlaneseq
    %v378 = vshrl.u32 %v377, 7
    %v379 = vsub.s32 0, %v378
    %v380 = vrot.slane %v375, %v379
    %v383 = vsel %vm193, %v369, 0
    %v386 = vsel %vm193, %v370, 0
    %388 = vmatprep.subr.mxu0 0.0
    %389 = vmatpush1.msra.mxu0 %v371
    %390 = vmatprep.subr.mxu0 0.0
    %391 = vmatpush1.msra.mxu0 %v372
    %392 = vmatprep.subr.mxu0 0.0
    %393 = vmatpush1.msra.mxu0 %v373
    %394 = vmatprep.subr.mxu0 0.0
    %395 = vmatpush1.msra.mxu0 %v374
    %396 = vmatprep.subr.mxu0 0.0
    %397 = vmatpush1.msra.mxu0 0.0
    %398 = vmatprep.subr.mxu0 0.0
    %399 = vmatpush1.msra.mxu0 0.0
    %400 = vmatprep.subr.mxu0 0.0
    %401 = vmatpush1.msra.mxu0 0.0
    %402 = vmatprep.subr.mxu0 0.0
    %403 = vmatpush1.msra.mxu0 0.0
    %404 = vmatprep.subr.mxu0 0.0
    %405 = vmatpush1.msra.mxu0 0.0
    %406 = vmatprep.subr.mxu0 0.0
    %407 = vmatpush1.msra.mxu0 0.0
    %408 = vmatprep.subr.mxu0 0.0
    %409 = vmatpush1.msra.mxu0 0.0
    %410 = vmatprep.subr.mxu0 0.0
    %411 = vmatpush1.msra.mxu0 0.0
    %412 = vmatprep.subr.mxu0 0.0
    %413 = vmatpush1.msra.mxu0 0.0
    %414 = vmatprep.subr.mxu0 0.0
    %415 = vmatpush1.msra.mxu0 0.0
    %416 = vmatprep.subr.mxu0 0.0
    %417 = vmatpush1.msra.mxu0 0.0
    %418 = vmatprep.subr.mxu0 0.0
    %419 = vmatpush1.msra.mxu0 0.0
    %420 = vmatprep.subr.mxu0 0.0
    %421 = vmatpush1.msra.mxu0 0.0
    %422 = vmatprep.subr.mxu0 0.0
    %423 = vmatpush1.msra.mxu0 0.0
    %424 = vmatprep.subr.mxu0 0.0
    %425 = vmatpush1.msra.mxu0 0.0
    %426 = vmatprep.subr.mxu0 0.0
    %427 = vmatpush1.msra.mxu0 0.0
    %428 = vmatprep.subr.mxu0 0.0
    %429 = vmatpush1.msra.mxu0 0.0
    %430 = vmatprep.subr.mxu0 0.0
    %431 = vmatpush1.msra.mxu0 0.0
    %432 = vmatprep.subr.mxu0 0.0
    %433 = vmatpush1.msra.mxu0 0.0
    %434 = vmatprep.subr.mxu0 0.0
    %435 = vmatpush1.msra.mxu0 0.0
    %436 = vmatprep.subr.mxu0 0.0
    %437 = vmatpush1.msra.mxu0 0.0
    %438 = vmatprep.subr.mxu0 0.0
    %439 = vmatpush1.msra.mxu0 0.0
    %440 = vmatprep.subr.mxu0 0.0
    %441 = vmatpush1.msra.mxu0 0.0
    %442 = vmatprep.subr.mxu0 0.0
    %443 = vmatpush1.msra.mxu0 0.0
    %444 = vmatprep.subr.mxu0 0.0
    %445 = vmatpush1.msra.mxu0 0.0
    %446 = vmatprep.subr.mxu0 0.0
    %447 = vmatpush1.msra.mxu0 0.0
    %448 = vmatprep.subr.mxu0 0.0
    %449 = vmatpush1.msra.mxu0 0.0
    %450 = vmatprep.subr.mxu0 0.0
    %451 = vmatpush1.msra.mxu0 0.0
    %452 = vmatprep.mubr.f32.mxu0 0.0
    %453 = vmatmul.mubr.f32.gmra.mrb[0].mxu0 %v383
    %v454 = vpop.f32.mrb[0].mxu0
    %v455 = vadd.f32 %v380, %v454
    %v456 = vpop.f32.mrb[0].mxu0
    %457 = vmatprep.mubr.f32.mxu0 0.0
    %458 = vmatmul.mubr.f32.gmra.mrb[0].mxu0 %v386
    %v459 = vpop.f32.mrb[0].mxu0
    %v460 = vadd.f32 %v380, %v459
    %v461 = vpop.f32.mrb[0].mxu0
    %462 = vdwg.mxu0
    %v463 = vld [vmem:[#allocation13] sm:$0xff]
    %v464 = vld [vmem:[#allocation13 + $0x8] sm:$0xff]
    %v465 = vld [vmem:[#allocation13 + $0x10] sm:$0xff]
    %v466 = vld [vmem:[#allocation13 + $0x18] sm:$0xff]
    %vm467 = vcmask 64512
    %v469 = vsel %vm467, %v267, 0
    %v472 = vsel %vm467, %v361, 0
    %474 = vmatprep.subr.mxu0 0.0
    %475 = vmatpush1.xpose.msra.mxu0 %v472
    %476 = vmatprep.subr.mxu0 0.0
    %477 = vmatpush1.xpose.msra.mxu0 0.0
    %478 = vmatprep.subr.mxu0 0.0
    %479 = vmatpush1.xpose.msra.mxu0 0.0
    %480 = vmatprep.subr.mxu0 0.0
    %481 = vmatpush1.xpose.msra.mxu0 0.0
    %482 = vmatprep.subr.mxu0 0.0
    %483 = vmatpush1.xpose.msra.mxu0 0.0
    %484 = vmatprep.subr.mxu0 0.0
    %485 = vmatpush1.xpose.msra.mxu0 0.0
    %486 = vmatprep.subr.mxu0 0.0
    %487 = vmatpush1.xpose.msra.mxu0 0.0
    %488 = vmatprep.subr.mxu0 0.0
    %489 = vmatpush1.xpose.msra.mxu0 0.0
    %490 = vmatprep.subr.mxu0 0.0
    %491 = vmatpush1.xpose.msra.mxu0 0.0
    %492 = vmatprep.subr.mxu0 0.0
    %493 = vmatpush1.xpose.msra.mxu0 0.0
    %494 = vmatprep.subr.mxu0 0.0
    %495 = vmatpush1.xpose.msra.mxu0 0.0
    %496 = vmatprep.subr.mxu0 0.0
    %497 = vmatpush1.xpose.msra.mxu0 0.0
    %498 = vmatprep.subr.mxu0 0.0
    %499 = vmatpush1.xpose.msra.mxu0 0.0
    %500 = vmatprep.subr.mxu0 0.0
    %501 = vmatpush1.xpose.msra.mxu0 0.0
    %502 = vmatprep.subr.mxu0 0.0
    %503 = vmatpush1.xpose.msra.mxu0 0.0
    %504 = vmatprep.subr.mxu0 0.0
    %505 = vmatpush1.xpose.msra.mxu0 0.0
    %506 = vmatprep.subr.mxu0 0.0
    %507 = vmatpush1.xpose.msra.mxu0 0.0
    %508 = vmatprep.subr.mxu0 0.0
    %509 = vmatpush1.xpose.msra.mxu0 0.0
    %510 = vmatprep.subr.mxu0 0.0
    %511 = vmatpush1.xpose.msra.mxu0 0.0
    %512 = vmatprep.subr.mxu0 0.0
    %513 = vmatpush1.xpose.msra.mxu0 0.0
    %514 = vmatprep.subr.mxu0 0.0
    %515 = vmatpush1.xpose.msra.mxu0 0.0
    %516 = vmatprep.subr.mxu0 0.0
    %517 = vmatpush1.xpose.msra.mxu0 0.0
    %518 = vmatprep.subr.mxu0 0.0
    %519 = vmatpush1.xpose.msra.mxu0 0.0
    %520 = vmatprep.subr.mxu0 0.0
    %521 = vmatpush1.xpose.msra.mxu0 0.0
    %522 = vmatprep.subr.mxu0 0.0
    %523 = vmatpush1.xpose.msra.mxu0 0.0
    %524 = vmatprep.subr.mxu0 0.0
    %525 = vmatpush1.xpose.msra.mxu0 0.0
    %526 = vmatprep.subr.mxu0 0.0
    %527 = vmatpush1.xpose.msra.mxu0 0.0
    %528 = vmatprep.subr.mxu0 0.0
    %529 = vmatpush1.xpose.msra.mxu0 0.0
    %530 = vmatprep.subr.mxu0 0.0
    %531 = vmatpush1.xpose.msra.mxu0 0.0
    %532 = vmatprep.subr.mxu0 0.0
    %533 = vmatpush1.xpose.msra.mxu0 0.0
    %534 = vmatprep.subr.mxu0 0.0
    %535 = vmatpush1.xpose.msra.mxu0 0.0
    %536 = vmatprep.subr.mxu0 0.0
    %537 = vmatpush1.xpose.msra.mxu0 0.0
    %538 = vmatprep.mubr.f32.mxu0 0.0
    %539 = vmatmul.mubr.f32.gmra.mrb[0].mxu0 %v469
    %v540 = vpop.f32.mrb[0].mxu0
    %v541 = vadd.f32 0.0, %v540
    %v542 = vpop.f32.mrb[0].mxu0
    %543 = vdwg.mxu0
    %v545 = vsel %vm467, %v272, 0
    %v548 = vsel %vm467, %v366, 0
    %550 = vmatprep.subr.mxu0 0.0
    %551 = vmatpush1.xpose.msra.mxu0 %v548
    %552 = vmatprep.subr.mxu0 0.0
    %553 = vmatpush1.xpose.msra.mxu0 0.0
    %554 = vmatprep.subr.mxu0 0.0
    %555 = vmatpush1.xpose.msra.mxu0 0.0
    %556 = vmatprep.subr.mxu0 0.0
    %557 = vmatpush1.xpose.msra.mxu0 0.0
    %558 = vmatprep.subr.mxu0 0.0
    %559 = vmatpush1.xpose.msra.mxu0 0.0
    %560 = vmatprep.subr.mxu0 0.0
    %561 = vmatpush1.xpose.msra.mxu0 0.0
    %562 = vmatprep.subr.mxu0 0.0
    %563 = vmatpush1.xpose.msra.mxu0 0.0
    %564 = vmatprep.subr.mxu0 0.0
    %565 = vmatpush1.xpose.msra.mxu0 0.0
    %566 = vmatprep.subr.mxu0 0.0
    %567 = vmatpush1.xpose.msra.mxu0 0.0
    %568 = vmatprep.subr.mxu0 0.0
    %569 = vmatpush1.xpose.msra.mxu0 0.0
    %570 = vmatprep.subr.mxu0 0.0
    %571 = vmatpush1.xpose.msra.mxu0 0.0
    %572 = vmatprep.subr.mxu0 0.0
    %573 = vmatpush1.xpose.msra.mxu0 0.0
    %574 = vmatprep.subr.mxu0 0.0
    %575 = vmatpush1.xpose.msra.mxu0 0.0
    %576 = vmatprep.subr.mxu0 0.0
    %577 = vmatpush1.xpose.msra.mxu0 0.0
    %578 = vmatprep.subr.mxu0 0.0
    %579 = vmatpush1.xpose.msra.mxu0 0.0
    %580 = vmatprep.subr.mxu0 0.0
    %581 = vmatpush1.xpose.msra.mxu0 0.0
    %582 = vmatprep.subr.mxu0 0.0
    %583 = vmatpush1.xpose.msra.mxu0 0.0
    %584 = vmatprep.subr.mxu0 0.0
    %585 = vmatpush1.xpose.msra.mxu0 0.0
    %586 = vmatprep.subr.mxu0 0.0
    %587 = vmatpush1.xpose.msra.mxu0 0.0
    %588 = vmatprep.subr.mxu0 0.0
    %589 = vmatpush1.xpose.msra.mxu0 0.0
    %590 = vmatprep.subr.mxu0 0.0
    %591 = vmatpush1.xpose.msra.mxu0 0.0
    %592 = vmatprep.subr.mxu0 0.0
    %593 = vmatpush1.xpose.msra.mxu0 0.0
    %594 = vmatprep.subr.mxu0 0.0
    %595 = vmatpush1.xpose.msra.mxu0 0.0
    %596 = vmatprep.subr.mxu0 0.0
    %597 = vmatpush1.xpose.msra.mxu0 0.0
    %598 = vmatprep.subr.mxu0 0.0
    %599 = vmatpush1.xpose.msra.mxu0 0.0
    %600 = vmatprep.subr.mxu0 0.0
    %601 = vmatpush1.xpose.msra.mxu0 0.0
    %602 = vmatprep.subr.mxu0 0.0
    %603 = vmatpush1.xpose.msra.mxu0 0.0
    %604 = vmatprep.subr.mxu0 0.0
    %605 = vmatpush1.xpose.msra.mxu0 0.0
    %606 = vmatprep.subr.mxu0 0.0
    %607 = vmatpush1.xpose.msra.mxu0 0.0
    %608 = vmatprep.subr.mxu0 0.0
    %609 = vmatpush1.xpose.msra.mxu0 0.0
    %610 = vmatprep.subr.mxu0 0.0
    %611 = vmatpush1.xpose.msra.mxu0 0.0
    %612 = vmatprep.subr.mxu0 0.0
    %613 = vmatpush1.xpose.msra.mxu0 0.0
    %614 = vmatprep.mubr.f32.mxu0 0.0
    %615 = vmatmul.mubr.f32.gmra.mrb[0].mxu0 %v545
    %v616 = vpop.f32.mrb[0].mxu0
    %v617 = vadd.f32 0.0, %v616
    %v618 = vpop.f32.mrb[0].mxu0
    %619 = vdwg.mxu0
    %v620 = vsel %vm467, %v541, -inf
    %621 = vmax.xlane.f32.xlu0 %v620
    %v622 = vpop.xlane.xlu0 %621
    %v623 = vsel %vm467, %v617, -inf
    %624 = vmax.xlane.f32.xlu0 %v623
    %v625 = vpop.xlane.xlu0 %624
    %v626 = vsub.f32 %v541, %v622
    %v627 = vsub.f32 %v617, %v625
    %v628 = vmul.f32 %v626, 1.442695
    %v629 = vpow.pop %v628
    %v630 = vmul.f32 %v627, 1.442695
    %v631 = vpow.pop %v630
    %v632 = vsel %vm467, %v629, 0.0
    %633 = vadd.xlane.f32.xlu0 %v632
    %v634 = vpop.xlane.xlu0 %633
    %v635 = vsel %vm467, %v631, 0.0
    %636 = vadd.xlane.f32.xlu0 %v635
    %v637 = vpop.xlane.xlu0 %636
    %v638 = vrcp.pop %v634
    %v639 = vrcp.pop %v637
    %v640 = vmul.f32 %v629, %v638
    %v641 = vmul.f32 %v631, %v639
    %v643 = vsel %vm467, %v640, 0
    %645 = vmatprep.subr.mxu0 0.0
    %646 = vmatpush1.msra.mxu0 %v455
    %647 = vmatprep.subr.mxu0 0.0
    %648 = vmatpush1.msra.mxu0 0.0
    %649 = vmatprep.subr.mxu0 0.0
    %650 = vmatpush1.msra.mxu0 0.0
    %651 = vmatprep.subr.mxu0 0.0
    %652 = vmatpush1.msra.mxu0 0.0
    %653 = vmatprep.subr.mxu0 0.0
    %654 = vmatpush1.msra.mxu0 0.0
    %655 = vmatprep.subr.mxu0 0.0
    %656 = vmatpush1.msra.mxu0 0.0
    %657 = vmatprep.subr.mxu0 0.0
    %658 = vmatpush1.msra.mxu0 0.0
    %659 = vmatprep.subr.mxu0 0.0
    %660 = vmatpush1.msra.mxu0 0.0
    %661 = vmatprep.subr.mxu0 0.0
    %662 = vmatpush1.msra.mxu0 0.0
    %663 = vmatprep.subr.mxu0 0.0
    %664 = vmatpush1.msra.mxu0 0.0
    %665 = vmatprep.subr.mxu0 0.0
    %666 = vmatpush1.msra.mxu0 0.0
    %667 = vmatprep.subr.mxu0 0.0
    %668 = vmatpush1.msra.mxu0 0.0
    %669 = vmatprep.subr.mxu0 0.0
    %670 = vmatpush1.msra.mxu0 0.0
    %671 = vmatprep.subr.mxu0 0.0
    %672 = vmatpush1.msra.mxu0 0.0
    %673 = vmatprep.subr.mxu0 0.0
    %674 = vmatpush1.msra.mxu0 0.0
    %675 = vmatprep.subr.mxu0 0.0
    %676 = vmatpush1.msra.mxu0 0.0
    %677 = vmatprep.subr.mxu0 0.0
    %678 = vmatpush1.msra.mxu0 0.0
    %679 = vmatprep.subr.mxu0 0.0
    %680 = vmatpush1.msra.mxu0 0.0
    %681 = vmatprep.subr.mxu0 0.0
    %682 = vmatpush1.msra.mxu0 0.0
    %683 = vmatprep.subr.mxu0 0.0
    %684 = vmatpush1.msra.mxu0 0.0
    %685 = vmatprep.subr.mxu0 0.0
    %686 = vmatpush1.msra.mxu0 0.0
    %687 = vmatprep.subr.mxu0 0.0
    %688 = vmatpush1.msra.mxu0 0.0
    %689 = vmatprep.subr.mxu0 0.0
    %690 = vmatpush1.msra.mxu0 0.0
    %691 = vmatprep.subr.mxu0 0.0
    %692 = vmatpush1.msra.mxu0 0.0
    %693 = vmatprep.subr.mxu0 0.0
    %694 = vmatpush1.msra.mxu0 0.0
    %695 = vmatprep.subr.mxu0 0.0
    %696 = vmatpush1.msra.mxu0 0.0
    %697 = vmatprep.subr.mxu0 0.0
    %698 = vmatpush1.msra.mxu0 0.0
    %699 = vmatprep.subr.mxu0 0.0
    %700 = vmatpush1.msra.mxu0 0.0
    %701 = vmatprep.subr.mxu0 0.0
    %702 = vmatpush1.msra.mxu0 0.0
    %703 = vmatprep.subr.mxu0 0.0
    %704 = vmatpush1.msra.mxu0 0.0
    %705 = vmatprep.subr.mxu0 0.0
    %706 = vmatpush1.msra.mxu0 0.0
    %707 = vmatprep.subr.mxu0 0.0
    %708 = vmatpush1.msra.mxu0 0.0
    %709 = vmatprep.mubr.f32.mxu0 0.0
    %710 = vmatmul.mubr.f32.gmra.mrb[0].mxu0 %v643
    %v711 = vpop.f32.mrb[0].mxu0
    %v712 = vadd.f32 0.0, %v711
    %v713 = vpop.f32.mrb[0].mxu0
    %714 = vdwg.mxu0
    %v716 = vsel %vm467, %v641, 0
    %718 = vmatprep.subr.mxu0 0.0
    %719 = vmatpush1.msra.mxu0 %v460
    %720 = vmatprep.subr.mxu0 0.0
    %721 = vmatpush1.msra.mxu0 0.0
    %722 = vmatprep.subr.mxu0 0.0
    %723 = vmatpush1.msra.mxu0 0.0
    %724 = vmatprep.subr.mxu0 0.0
    %725 = vmatpush1.msra.mxu0 0.0
    %726 = vmatprep.subr.mxu0 0.0
    %727 = vmatpush1.msra.mxu0 0.0
    %728 = vmatprep.subr.mxu0 0.0
    %729 = vmatpush1.msra.mxu0 0.0
    %730 = vmatprep.subr.mxu0 0.0
    %731 = vmatpush1.msra.mxu0 0.0
    %732 = vmatprep.subr.mxu0 0.0
    %733 = vmatpush1.msra.mxu0 0.0
    %734 = vmatprep.subr.mxu0 0.0
    %735 = vmatpush1.msra.mxu0 0.0
    %736 = vmatprep.subr.mxu0 0.0
    %737 = vmatpush1.msra.mxu0 0.0
    %738 = vmatprep.subr.mxu0 0.0
    %739 = vmatpush1.msra.mxu0 0.0
    %740 = vmatprep.subr.mxu0 0.0
    %741 = vmatpush1.msra.mxu0 0.0
    %742 = vmatprep.subr.mxu0 0.0
    %743 = vmatpush1.msra.mxu0 0.0
    %744 = vmatprep.subr.mxu0 0.0
    %745 = vmatpush1.msra.mxu0 0.0
    %746 = vmatprep.subr.mxu0 0.0
    %747 = vmatpush1.msra.mxu0 0.0
    %748 = vmatprep.subr.mxu0 0.0
    %749 = vmatpush1.msra.mxu0 0.0
    %750 = vmatprep.subr.mxu0 0.0
    %751 = vmatpush1.msra.mxu0 0.0
    %752 = vmatprep.subr.mxu0 0.0
    %753 = vmatpush1.msra.mxu0 0.0
    %754 = vmatprep.subr.mxu0 0.0
    %755 = vmatpush1.msra.mxu0 0.0
    %756 = vmatprep.subr.mxu0 0.0
    %757 = vmatpush1.msra.mxu0 0.0
    %758 = vmatprep.subr.mxu0 0.0
    %759 = vmatpush1.msra.mxu0 0.0
    %760 = vmatprep.subr.mxu0 0.0
    %761 = vmatpush1.msra.mxu0 0.0
    %762 = vmatprep.subr.mxu0 0.0
    %763 = vmatpush1.msra.mxu0 0.0
    %764 = vmatprep.subr.mxu0 0.0
    %765 = vmatpush1.msra.mxu0 0.0
    %766 = vmatprep.subr.mxu0 0.0
    %767 = vmatpush1.msra.mxu0 0.0
    %768 = vmatprep.subr.mxu0 0.0
    %769 = vmatpush1.msra.mxu0 0.0
    %770 = vmatprep.subr.mxu0 0.0
    %771 = vmatpush1.msra.mxu0 0.0
    %772 = vmatprep.subr.mxu0 0.0
    %773 = vmatpush1.msra.mxu0 0.0
    %774 = vmatprep.subr.mxu0 0.0
    %775 = vmatpush1.msra.mxu0 0.0
    %776 = vmatprep.subr.mxu0 0.0
    %777 = vmatpush1.msra.mxu0 0.0
    %778 = vmatprep.subr.mxu0 0.0
    %779 = vmatpush1.msra.mxu0 0.0
    %780 = vmatprep.subr.mxu0 0.0
    %781 = vmatpush1.msra.mxu0 0.0
    %782 = vmatprep.mubr.f32.mxu0 0.0
    %783 = vmatmul.mubr.f32.gmra.mrb[0].mxu0 %v716
    %v784 = vpop.f32.mrb[0].mxu0
    %v785 = vadd.f32 0.0, %v784
    %v786 = vpop.f32.mrb[0].mxu0
    %787 = vdwg.mxu0
    %788 = vrot.lane.b32.xlu0 %v267, 120
    %v789 = vpop.permute.xlu0 %788
    %790 = vrot.lane.b32.xlu0 %v361, 120
    %v791 = vpop.permute.xlu0 %790
    %v792 = vsel %vm467, %v789, 0
    %v794 = vsel %vm467, %v791, 0
    %796 = vmatprep.subr.mxu0 0.0
    %797 = vmatpush1.xpose.msra.mxu0 %v794
    %798 = vmatprep.subr.mxu0 0.0
    %799 = vmatpush1.xpose.msra.mxu0 0.0
    %800 = vmatprep.subr.mxu0 0.0
    %801 = vmatpush1.xpose.msra.mxu0 0.0
    %802 = vmatprep.subr.mxu0 0.0
    %803 = vmatpush1.xpose.msra.mxu0 0.0
    %804 = vmatprep.subr.mxu0 0.0
    %805 = vmatpush1.xpose.msra.mxu0 0.0
    %806 = vmatprep.subr.mxu0 0.0
    %807 = vmatpush1.xpose.msra.mxu0 0.0
    %808 = vmatprep.subr.mxu0 0.0
    %809 = vmatpush1.xpose.msra.mxu0 0.0
    %810 = vmatprep.subr.mxu0 0.0
    %811 = vmatpush1.xpose.msra.mxu0 0.0
    %812 = vmatprep.subr.mxu0 0.0
    %813 = vmatpush1.xpose.msra.mxu0 0.0
    %814 = vmatprep.subr.mxu0 0.0
    %815 = vmatpush1.xpose.msra.mxu0 0.0
    %816 = vmatprep.subr.mxu0 0.0
    %817 = vmatpush1.xpose.msra.mxu0 0.0
    %818 = vmatprep.subr.mxu0 0.0
    %819 = vmatpush1.xpose.msra.mxu0 0.0
    %820 = vmatprep.subr.mxu0 0.0
    %821 = vmatpush1.xpose.msra.mxu0 0.0
    %822 = vmatprep.subr.mxu0 0.0
    %823 = vmatpush1.xpose.msra.mxu0 0.0
    %824 = vmatprep.subr.mxu0 0.0
    %825 = vmatpush1.xpose.msra.mxu0 0.0
    %826 = vmatprep.subr.mxu0 0.0
    %827 = vmatpush1.xpose.msra.mxu0 0.0
    %828 = vmatprep.subr.mxu0 0.0
    %829 = vmatpush1.xpose.msra.mxu0 0.0
    %830 = vmatprep.subr.mxu0 0.0
    %831 = vmatpush1.xpose.msra.mxu0 0.0
    %832 = vmatprep.subr.mxu0 0.0
    %833 = vmatpush1.xpose.msra.mxu0 0.0
    %834 = vmatprep.subr.mxu0 0.0
    %835 = vmatpush1.xpose.msra.mxu0 0.0
    %836 = vmatprep.subr.mxu0 0.0
    %837 = vmatpush1.xpose.msra.mxu0 0.0
    %838 = vmatprep.subr.mxu0 0.0
    %839 = vmatpush1.xpose.msra.mxu0 0.0
    %840 = vmatprep.subr.mxu0 0.0
    %841 = vmatpush1.xpose.msra.mxu0 0.0
    %842 = vmatprep.subr.mxu0 0.0
    %843 = vmatpush1.xpose.msra.mxu0 0.0
    %844 = vmatprep.subr.mxu0 0.0
    %845 = vmatpush1.xpose.msra.mxu0 0.0
    %846 = vmatprep.subr.mxu0 0.0
    %847 = vmatpush1.xpose.msra.mxu0 0.0
    %848 = vmatprep.subr.mxu0 0.0
    %849 = vmatpush1.xpose.msra.mxu0 0.0
    %850 = vmatprep.subr.mxu0 0.0
    %851 = vmatpush1.xpose.msra.mxu0 0.0
    %852 = vmatprep.subr.mxu0 0.0
    %853 = vmatpush1.xpose.msra.mxu0 0.0
    %854 = vmatprep.subr.mxu0 0.0
    %855 = vmatpush1.xpose.msra.mxu0 0.0
    %856 = vmatprep.subr.mxu0 0.0
    %857 = vmatpush1.xpose.msra.mxu0 0.0
    %858 = vmatprep.subr.mxu0 0.0
    %859 = vmatpush1.xpose.msra.mxu0 0.0
    %860 = vmatprep.mubr.f32.mxu0 0.0
    %861 = vmatmul.mubr.f32.gmra.mrb[0].mxu0 %v792
    %v862 = vpop.f32.mrb[0].mxu0
    %v863 = vadd.f32 0.0, %v862
    %v864 = vpop.f32.mrb[0].mxu0
    %865 = vdwg.mxu0
    %866 = vrot.lane.b32.xlu0 %v272, 120
    %v867 = vpop.permute.xlu0 %866
    %868 = vrot.lane.b32.xlu0 %v366, 120
    %v869 = vpop.permute.xlu0 %868
    %v870 = vsel %vm467, %v867, 0
    %v872 = vsel %vm467, %v869, 0
    %874 = vmatprep.subr.mxu0 0.0
    %875 = vmatpush1.xpose.msra.mxu0 %v872
    %876 = vmatprep.subr.mxu0 0.0
    %877 = vmatpush1.xpose.msra.mxu0 0.0
    %878 = vmatprep.subr.mxu0 0.0
    %879 = vmatpush1.xpose.msra.mxu0 0.0
    %880 = vmatprep.subr.mxu0 0.0
    %881 = vmatpush1.xpose.msra.mxu0 0.0
    %882 = vmatprep.subr.mxu0 0.0
    %883 = vmatpush1.xpose.msra.mxu0 0.0
    %884 = vmatprep.subr.mxu0 0.0
    %885 = vmatpush1.xpose.msra.mxu0 0.0
    %886 = vmatprep.subr.mxu0 0.0
    %887 = vmatpush1.xpose.msra.mxu0 0.0
    %888 = vmatprep.subr.mxu0 0.0
    %889 = vmatpush1.xpose.msra.mxu0 0.0
    %890 = vmatprep.subr.mxu0 0.0
    %891 = vmatpush1.xpose.msra.mxu0 0.0
    %892 = vmatprep.subr.mxu0 0.0
    %893 = vmatpush1.xpose.msra.mxu0 0.0
    %894 = vmatprep.subr.mxu0 0.0
    %895 = vmatpush1.xpose.msra.mxu0 0.0
    %896 = vmatprep.subr.mxu0 0.0
    %897 = vmatpush1.xpose.msra.mxu0 0.0
    %898 = vmatprep.subr.mxu0 0.0
    %899 = vmatpush1.xpose.msra.mxu0 0.0
    %900 = vmatprep.subr.mxu0 0.0
    %901 = vmatpush1.xpose.msra.mxu0 0.0
    %902 = vmatprep.subr.mxu0 0.0
    %903 = vmatpush1.xpose.msra.mxu0 0.0
    %904 = vmatprep.subr.mxu0 0.0
    %905 = vmatpush1.xpose.msra.mxu0 0.0
    %906 = vmatprep.subr.mxu0 0.0
    %907 = vmatpush1.xpose.msra.mxu0 0.0
    %908 = vmatprep.subr.mxu0 0.0
    %909 = vmatpush1.xpose.msra.mxu0 0.0
    %910 = vmatprep.subr.mxu0 0.0
    %911 = vmatpush1.xpose.msra.mxu0 0.0
    %912 = vmatprep.subr.mxu0 0.0
    %913 = vmatpush1.xpose.msra.mxu0 0.0
    %914 = vmatprep.subr.mxu0 0.0
    %915 = vmatpush1.xpose.msra.mxu0 0.0
    %916 = vmatprep.subr.mxu0 0.0
    %917 = vmatpush1.xpose.msra.mxu0 0.0
    %918 = vmatprep.subr.mxu0 0.0
    %919 = vmatpush1.xpose.msra.mxu0 0.0
    %920 = vmatprep.subr.mxu0 0.0
    %921 = vmatpush1.xpose.msra.mxu0 0.0
    %922 = vmatprep.subr.mxu0 0.0
    %923 = vmatpush1.xpose.msra.mxu0 0.0
    %924 = vmatprep.subr.mxu0 0.0
    %925 = vmatpush1.xpose.msra.mxu0 0.0
    %926 = vmatprep.subr.mxu0 0.0
    %927 = vmatpush1.xpose.msra.mxu0 0.0
    %928 = vmatprep.subr.mxu0 0.0
    %929 = vmatpush1.xpose.msra.mxu0 0.0
    %930 = vmatprep.subr.mxu0 0.0
    %931 = vmatpush1.xpose.msra.mxu0 0.0
    %932 = vmatprep.subr.mxu0 0.0
    %933 = vmatpush1.xpose.msra.mxu0 0.0
    %934 = vmatprep.subr.mxu0 0.0
    %935 = vmatpush1.xpose.msra.mxu0 0.0
    %936 = vmatprep.subr.mxu0 0.0
    %937 = vmatpush1.xpose.msra.mxu0 0.0
    %938 = vmatprep.mubr.f32.mxu0 0.0
    %939 = vmatmul.mubr.f32.gmra.mrb[0].mxu0 %v870
    %v940 = vpop.f32.mrb[0].mxu0
    %v941 = vadd.f32 0.0, %v940
    %v942 = vpop.f32.mrb[0].mxu0
    %943 = vdwg.mxu0
    %v944 = vsel %vm467, %v863, -inf
    %945 = vmax.xlane.f32.xlu0 %v944
    %v946 = vpop.xlane.xlu0 %945
    %v947 = vsel %vm467, %v941, -inf
    %948 = vmax.xlane.f32.xlu0 %v947
    %v949 = vpop.xlane.xlu0 %948
    %v950 = vsub.f32 %v863, %v946
    %v951 = vsub.f32 %v941, %v949
    %v952 = vmul.f32 %v950, 1.442695
    %v953 = vpow.pop %v952
    %v954 = vmul.f32 %v951, 1.442695
    %v955 = vpow.pop %v954
    %v956 = vsel %vm467, %v953, 0.0
    %957 = vadd.xlane.f32.xlu0 %v956
    %v958 = vpop.xlane.xlu0 %957
    %v959 = vsel %vm467, %v955, 0.0
    %960 = vadd.xlane.f32.xlu0 %v959
    %v961 = vpop.xlane.xlu0 %960
    %v962 = vrcp.pop %v958
    %v963 = vrcp.pop %v961
    %v964 = vmul.f32 %v953, %v962
    %v965 = vmul.f32 %v955, %v963
    %967 = vrot.lane.b32.xlu0 %v455, 120
    %v968 = vpop.permute.xlu0 %967
    %v971 = vsel %vm467, %v964, 0
    %973 = vmatprep.subr.mxu0 0.0
    %974 = vmatpush1.msra.mxu0 %v968
    %975 = vmatprep.subr.mxu0 0.0
    %976 = vmatpush1.msra.mxu0 0.0
    %977 = vmatprep.subr.mxu0 0.0
    %978 = vmatpush1.msra.mxu0 0.0
    %979 = vmatprep.subr.mxu0 0.0
    %980 = vmatpush1.msra.mxu0 0.0
    %981 = vmatprep.subr.mxu0 0.0
    %982 = vmatpush1.msra.mxu0 0.0
    %983 = vmatprep.subr.mxu0 0.0
    %984 = vmatpush1.msra.mxu0 0.0
    %985 = vmatprep.subr.mxu0 0.0
    %986 = vmatpush1.msra.mxu0 0.0
    %987 = vmatprep.subr.mxu0 0.0
    %988 = vmatpush1.msra.mxu0 0.0
    %989 = vmatprep.subr.mxu0 0.0
    %990 = vmatpush1.msra.mxu0 0.0
    %991 = vmatprep.subr.mxu0 0.0
    %992 = vmatpush1.msra.mxu0 0.0
    %993 = vmatprep.subr.mxu0 0.0
    %994 = vmatpush1.msra.mxu0 0.0
    %995 = vmatprep.subr.mxu0 0.0
    %996 = vmatpush1.msra.mxu0 0.0
    %997 = vmatprep.subr.mxu0 0.0
    %998 = vmatpush1.msra.mxu0 0.0
    %999 = vmatprep.subr.mxu0 0.0
    %1000 = vmatpush1.msra.mxu0 0.0
    %1001 = vmatprep.subr.mxu0 0.0
    %1002 = vmatpush1.msra.mxu0 0.0
    %1003 = vmatprep.subr.mxu0 0.0
    %1004 = vmatpush1.msra.mxu0 0.0
    %1005 = vmatprep.subr.mxu0 0.0
    %1006 = vmatpush1.msra.mxu0 0.0
    %1007 = vmatprep.subr.mxu0 0.0
    %1008 = vmatpush1.msra.mxu0 0.0
    %1009 = vmatprep.subr.mxu0 0.0
    %1010 = vmatpush1.msra.mxu0 0.0
    %1011 = vmatprep.subr.mxu0 0.0
    %1012 = vmatpush1.msra.mxu0 0.0
    %1013 = vmatprep.subr.mxu0 0.0
    %1014 = vmatpush1.msra.mxu0 0.0
    %1015 = vmatprep.subr.mxu0 0.0
    %1016 = vmatpush1.msra.mxu0 0.0
    %1017 = vmatprep.subr.mxu0 0.0
    %1018 = vmatpush1.msra.mxu0 0.0
    %1019 = vmatprep.subr.mxu0 0.0
    %1020 = vmatpush1.msra.mxu0 0.0
    %1021 = vmatprep.subr.mxu0 0.0
    %1022 = vmatpush1.msra.mxu0 0.0
    %1023 = vmatprep.subr.mxu0 0.0
    %1024 = vmatpush1.msra.mxu0 0.0
    %1025 = vmatprep.subr.mxu0 0.0
    %1026 = vmatpush1.msra.mxu0 0.0
    %1027 = vmatprep.subr.mxu0 0.0
    %1028 = vmatpush1.msra.mxu0 0.0
    %1029 = vmatprep.subr.mxu0 0.0
    %1030 = vmatpush1.msra.mxu0 0.0
    %1031 = vmatprep.subr.mxu0 0.0
    %1032 = vmatpush1.msra.mxu0 0.0
    %1033 = vmatprep.subr.mxu0 0.0
    %1034 = vmatpush1.msra.mxu0 0.0
    %1035 = vmatprep.subr.mxu0 0.0
    %1036 = vmatpush1.msra.mxu0 0.0
    %1037 = vmatprep.mubr.f32.mxu0 0.0
    %1038 = vmatmul.mubr.f32.gmra.mrb[0].mxu0 %v971
    %v1039 = vpop.f32.mrb[0].mxu0
    %v1040 = vadd.f32 0.0, %v1039
    %v1041 = vpop.f32.mrb[0].mxu0
    %1042 = vdwg.mxu0
    %1044 = vrot.lane.b32.xlu0 %v460, 120
    %v1045 = vpop.permute.xlu0 %1044
    %v1048 = vsel %vm467, %v965, 0
    %1050 = vmatprep.subr.mxu0 0.0
    %1051 = vmatpush1.msra.mxu0 %v1045
    %1052 = vmatprep.subr.mxu0 0.0
    %1053 = vmatpush1.msra.mxu0 0.0
    %1054 = vmatprep.subr.mxu0 0.0
    %1055 = vmatpush1.msra.mxu0 0.0
    %1056 = vmatprep.subr.mxu0 0.0
    %1057 = vmatpush1.msra.mxu0 0.0
    %1058 = vmatprep.subr.mxu0 0.0
    %1059 = vmatpush1.msra.mxu0 0.0
    %1060 = vmatprep.subr.mxu0 0.0
    %1061 = vmatpush1.msra.mxu0 0.0
    %1062 = vmatprep.subr.mxu0 0.0
    %1063 = vmatpush1.msra.mxu0 0.0
    %1064 = vmatprep.subr.mxu0 0.0
    %1065 = vmatpush1.msra.mxu0 0.0
    %1066 = vmatprep.subr.mxu0 0.0
    %1067 = vmatpush1.msra.mxu0 0.0
    %1068 = vmatprep.subr.mxu0 0.0
    %1069 = vmatpush1.msra.mxu0 0.0
    %1070 = vmatprep.subr.mxu0 0.0
    %1071 = vmatpush1.msra.mxu0 0.0
    %1072 = vmatprep.subr.mxu0 0.0
    %1073 = vmatpush1.msra.mxu0 0.0
    %1074 = vmatprep.subr.mxu0 0.0
    %1075 = vmatpush1.msra.mxu0 0.0
    %1076 = vmatprep.subr.mxu0 0.0
    %1077 = vmatpush1.msra.mxu0 0.0
    %1078 = vmatprep.subr.mxu0 0.0
    %1079 = vmatpush1.msra.mxu0 0.0
    %1080 = vmatprep.subr.mxu0 0.0
    %1081 = vmatpush1.msra.mxu0 0.0
    %1082 = vmatprep.subr.mxu0 0.0
    %1083 = vmatpush1.msra.mxu0 0.0
    %1084 = vmatprep.subr.mxu0 0.0
    %1085 = vmatpush1.msra.mxu0 0.0
    %1086 = vmatprep.subr.mxu0 0.0
    %1087 = vmatpush1.msra.mxu0 0.0
    %1088 = vmatprep.subr.mxu0 0.0
    %1089 = vmatpush1.msra.mxu0 0.0
    %1090 = vmatprep.subr.mxu0 0.0
    %1091 = vmatpush1.msra.mxu0 0.0
    %1092 = vmatprep.subr.mxu0 0.0
    %1093 = vmatpush1.msra.mxu0 0.0
    %1094 = vmatprep.subr.mxu0 0.0
    %1095 = vmatpush1.msra.mxu0 0.0
    %1096 = vmatprep.subr.mxu0 0.0
    %1097 = vmatpush1.msra.mxu0 0.0
    %1098 = vmatprep.subr.mxu0 0.0
    %1099 = vmatpush1.msra.mxu0 0.0
    %1100 = vmatprep.subr.mxu0 0.0
    %1101 = vmatpush1.msra.mxu0 0.0
    %1102 = vmatprep.subr.mxu0 0.0
    %1103 = vmatpush1.msra.mxu0 0.0
    %1104 = vmatprep.subr.mxu0 0.0
    %1105 = vmatpush1.msra.mxu0 0.0
    %1106 = vmatprep.subr.mxu0 0.0
    %1107 = vmatpush1.msra.mxu0 0.0
    %1108 = vmatprep.subr.mxu0 0.0
    %1109 = vmatpush1.msra.mxu0 0.0
    %1110 = vmatprep.subr.mxu0 0.0
    %1111 = vmatpush1.msra.mxu0 0.0
    %1112 = vmatprep.subr.mxu0 0.0
    %1113 = vmatpush1.msra.mxu0 0.0
    %1114 = vmatprep.mubr.f32.mxu0 0.0
    %1115 = vmatmul.mubr.f32.gmra.mrb[0].mxu0 %v1048
    %v1116 = vpop.f32.mrb[0].mxu0
    %v1117 = vadd.f32 0.0, %v1116
    %v1118 = vpop.f32.mrb[0].mxu0
    %1119 = vdwg.mxu0
    %v1121 = vsel %vm467, %v1040, 0
    %v1124 = vsel %vm467, %v1117, 0
    %1126 = vmatprep.subr.mxu0 0.0
    %1127 = vmatpush1.msra.mxu0 %v464
    %1128 = vmatprep.subr.mxu0 0.0
    %1129 = vmatpush1.msra.mxu0 0.0
    %1130 = vmatprep.subr.mxu0 0.0
    %1131 = vmatpush1.msra.mxu0 0.0
    %1132 = vmatprep.subr.mxu0 0.0
    %1133 = vmatpush1.msra.mxu0 0.0
    %1134 = vmatprep.subr.mxu0 0.0
    %1135 = vmatpush1.msra.mxu0 0.0
    %1136 = vmatprep.subr.mxu0 0.0
    %1137 = vmatpush1.msra.mxu0 0.0
    %1138 = vmatprep.subr.mxu0 0.0
    %1139 = vmatpush1.msra.mxu0 0.0
    %1140 = vmatprep.subr.mxu0 0.0
    %1141 = vmatpush1.msra.mxu0 0.0
    %1142 = vmatprep.subr.mxu0 0.0
    %1143 = vmatpush1.msra.mxu0 0.0
    %1144 = vmatprep.subr.mxu0 0.0
    %1145 = vmatpush1.msra.mxu0 0.0
    %1146 = vmatprep.subr.mxu0 0.0
    %1147 = vmatpush1.msra.mxu0 0.0
    %1148 = vmatprep.subr.mxu0 0.0
    %1149 = vmatpush1.msra.mxu0 0.0
    %1150 = vmatprep.subr.mxu0 0.0
    %1151 = vmatpush1.msra.mxu0 0.0
    %1152 = vmatprep.subr.mxu0 0.0
    %1153 = vmatpush1.msra.mxu0 0.0
    %1154 = vmatprep.subr.mxu0 0.0
    %1155 = vmatpush1.msra.mxu0 0.0
    %1156 = vmatprep.subr.mxu0 0.0
    %1157 = vmatpush1.msra.mxu0 0.0
    %1158 = vmatprep.subr.mxu0 0.0
    %1159 = vmatpush1.msra.mxu0 0.0
    %1160 = vmatprep.subr.mxu0 0.0
    %1161 = vmatpush1.msra.mxu0 0.0
    %1162 = vmatprep.subr.mxu0 0.0
    %1163 = vmatpush1.msra.mxu0 0.0
    %1164 = vmatprep.subr.mxu0 0.0
    %1165 = vmatpush1.msra.mxu0 0.0
    %1166 = vmatprep.subr.mxu0 0.0
    %1167 = vmatpush1.msra.mxu0 0.0
    %1168 = vmatprep.subr.mxu0 0.0
    %1169 = vmatpush1.msra.mxu0 0.0
    %1170 = vmatprep.subr.mxu0 0.0
    %1171 = vmatpush1.msra.mxu0 0.0
    %1172 = vmatprep.subr.mxu0 0.0
    %1173 = vmatpush1.msra.mxu0 0.0
    %1174 = vmatprep.subr.mxu0 0.0
    %1175 = vmatpush1.msra.mxu0 0.0
    %1176 = vmatprep.subr.mxu0 0.0
    %1177 = vmatpush1.msra.mxu0 0.0
    %1178 = vmatprep.subr.mxu0 0.0
    %1179 = vmatpush1.msra.mxu0 0.0
    %1180 = vmatprep.subr.mxu0 0.0
    %1181 = vmatpush1.msra.mxu0 0.0
    %1182 = vmatprep.subr.mxu0 0.0
    %1183 = vmatpush1.msra.mxu0 0.0
    %1184 = vmatprep.subr.mxu0 0.0
    %1185 = vmatpush1.msra.mxu0 0.0
    %1186 = vmatprep.subr.mxu0 0.0
    %1187 = vmatpush1.msra.mxu0 0.0
    %1188 = vmatprep.subr.mxu0 0.0
    %1189 = vmatpush1.msra.mxu0 0.0
    %1190 = vmatprep.mubr.f32.mxu0 0.0
    %1191 = vmatmul.mubr.f32.gmra.mrb[0].mxu0 %v1121
    %v1192 = vpop.f32.mrb[0].mxu0
    %v1193 = vadd.f32 0.0, %v1192
    %v1194 = vpop.f32.mrb[0].mxu0
    %1195 = vmatprep.mubr.f32.mxu0 0.0
    %1196 = vmatmul.mubr.f32.gmra.mrb[0].mxu0 %v1124
    %v1197 = vpop.f32.mrb[0].mxu0
    %v1198 = vadd.f32 0.0, %v1197
    %v1199 = vpop.f32.mrb[0].mxu0
    %1200 = vdwg.mxu0
    %v1202 = vsel %vm467, %v712, 0
    %v1205 = vsel %vm467, %v785, 0
    %1207 = vmatprep.subr.mxu0 0.0
    %1208 = vmatpush1.msra.mxu0 %v463
    %1209 = vmatprep.subr.mxu0 0.0
    %1210 = vmatpush1.msra.mxu0 0.0
    %1211 = vmatprep.subr.mxu0 0.0
    %1212 = vmatpush1.msra.mxu0 0.0
    %1213 = vmatprep.subr.mxu0 0.0
    %1214 = vmatpush1.msra.mxu0 0.0
    %1215 = vmatprep.subr.mxu0 0.0
    %1216 = vmatpush1.msra.mxu0 0.0
    %1217 = vmatprep.subr.mxu0 0.0
    %1218 = vmatpush1.msra.mxu0 0.0
    %1219 = vmatprep.subr.mxu0 0.0
    %1220 = vmatpush1.msra.mxu0 0.0
    %1221 = vmatprep.subr.mxu0 0.0
    %1222 = vmatpush1.msra.mxu0 0.0
    %1223 = vmatprep.subr.mxu0 0.0
    %1224 = vmatpush1.msra.mxu0 0.0
    %1225 = vmatprep.subr.mxu0 0.0
    %1226 = vmatpush1.msra.mxu0 0.0
    %1227 = vmatprep.subr.mxu0 0.0
    %1228 = vmatpush1.msra.mxu0 0.0
    %1229 = vmatprep.subr.mxu0 0.0
    %1230 = vmatpush1.msra.mxu0 0.0
    %1231 = vmatprep.subr.mxu0 0.0
    %1232 = vmatpush1.msra.mxu0 0.0
    %1233 = vmatprep.subr.mxu0 0.0
    %1234 = vmatpush1.msra.mxu0 0.0
    %1235 = vmatprep.subr.mxu0 0.0
    %1236 = vmatpush1.msra.mxu0 0.0
    %1237 = vmatprep.subr.mxu0 0.0
    %1238 = vmatpush1.msra.mxu0 0.0
    %1239 = vmatprep.subr.mxu0 0.0
    %1240 = vmatpush1.msra.mxu0 0.0
    %1241 = vmatprep.subr.mxu0 0.0
    %1242 = vmatpush1.msra.mxu0 0.0
    %1243 = vmatprep.subr.mxu0 0.0
    %1244 = vmatpush1.msra.mxu0 0.0
    %1245 = vmatprep.subr.mxu0 0.0
    %1246 = vmatpush1.msra.mxu0 0.0
    %1247 = vmatprep.subr.mxu0 0.0
    %1248 = vmatpush1.msra.mxu0 0.0
    %1249 = vmatprep.subr.mxu0 0.0
    %1250 = vmatpush1.msra.mxu0 0.0
    %1251 = vmatprep.subr.mxu0 0.0
    %1252 = vmatpush1.msra.mxu0 0.0
    %1253 = vmatprep.subr.mxu0 0.0
    %1254 = vmatpush1.msra.mxu0 0.0
    %1255 = vmatprep.subr.mxu0 0.0
    %1256 = vmatpush1.msra.mxu0 0.0
    %1257 = vmatprep.subr.mxu0 0.0
    %1258 = vmatpush1.msra.mxu0 0.0
    %1259 = vmatprep.subr.mxu0 0.0
    %1260 = vmatpush1.msra.mxu0 0.0
    %1261 = vmatprep.subr.mxu0 0.0
    %1262 = vmatpush1.msra.mxu0 0.0
    %1263 = vmatprep.subr.mxu0 0.0
    %1264 = vmatpush1.msra.mxu0 0.0
    %1265 = vmatprep.subr.mxu0 0.0
    %1266 = vmatpush1.msra.mxu0 0.0
    %1267 = vmatprep.subr.mxu0 0.0
    %1268 = vmatpush1.msra.mxu0 0.0
    %1269 = vmatprep.subr.mxu0 0.0
    %1270 = vmatpush1.msra.mxu0 0.0
    %1271 = vmatprep.mubr.f32.mxu0 0.0
    %1272 = vmatmul.mubr.f32.gmra.mrb[0].mxu0 %v1202
    %v1273 = vpop.f32.mrb[0].mxu0
    %v1274 = vadd.f32 %v1193, %v1273
    %v1275 = vpop.f32.mrb[0].mxu0
    %1276 = vmatprep.mubr.f32.mxu0 0.0
    %1277 = vmatmul.mubr.f32.gmra.mrb[0].mxu0 %v1205
    %v1278 = vpop.f32.mrb[0].mxu0
    %v1279 = vadd.f32 %v1198, %v1278
    %v1280 = vpop.f32.mrb[0].mxu0
    %1281 = vdwg.mxu0
    %1282 = vrot.lane.b32.xlu0 %v267, 112
    %v1283 = vpop.permute.xlu0 %1282
    %1284 = vrot.lane.b32.xlu0 %v361, 112
    %v1285 = vpop.permute.xlu0 %1284
    %v1286 = vsel %vm467, %v1283, 0
    %v1288 = vsel %vm467, %v1285, 0
    %1290 = vmatprep.subr.mxu0 0.0
    %1291 = vmatpush1.xpose.msra.mxu0 %v1288
    %1292 = vmatprep.subr.mxu0 0.0
    %1293 = vmatpush1.xpose.msra.mxu0 0.0
    %1294 = vmatprep.subr.mxu0 0.0
    %1295 = vmatpush1.xpose.msra.mxu0 0.0
    %1296 = vmatprep.subr.mxu0 0.0
    %1297 = vmatpush1.xpose.msra.mxu0 0.0
    %1298 = vmatprep.subr.mxu0 0.0
    %1299 = vmatpush1.xpose.msra.mxu0 0.0
    %1300 = vmatprep.subr.mxu0 0.0
    %1301 = vmatpush1.xpose.msra.mxu0 0.0
    %1302 = vmatprep.subr.mxu0 0.0
    %1303 = vmatpush1.xpose.msra.mxu0 0.0
    %1304 = vmatprep.subr.mxu0 0.0
    %1305 = vmatpush1.xpose.msra.mxu0 0.0
    %1306 = vmatprep.subr.mxu0 0.0
    %1307 = vmatpush1.xpose.msra.mxu0 0.0
    %1308 = vmatprep.subr.mxu0 0.0
    %1309 = vmatpush1.xpose.msra.mxu0 0.0
    %1310 = vmatprep.subr.mxu0 0.0
    %1311 = vmatpush1.xpose.msra.mxu0 0.0
    %1312 = vmatprep.subr.mxu0 0.0
    %1313 = vmatpush1.xpose.msra.mxu0 0.0
    %1314 = vmatprep.subr.mxu0 0.0
    %1315 = vmatpush1.xpose.msra.mxu0 0.0
    %1316 = vmatprep.subr.mxu0 0.0
    %1317 = vmatpush1.xpose.msra.mxu0 0.0
    %1318 = vmatprep.subr.mxu0 0.0
    %1319 = vmatpush1.xpose.msra.mxu0 0.0
    %1320 = vmatprep.subr.mxu0 0.0
    %1321 = vmatpush1.xpose.msra.mxu0 0.0
    %1322 = vmatprep.subr.mxu0 0.0
    %1323 = vmatpush1.xpose.msra.mxu0 0.0
    %1324 = vmatprep.subr.mxu0 0.0
    %1325 = vmatpush1.xpose.msra.mxu0 0.0
    %1326 = vmatprep.subr.mxu0 0.0
    %1327 = vmatpush1.xpose.msra.mxu0 0.0
    %1328 = vmatprep.subr.mxu0 0.0
    %1329 = vmatpush1.xpose.msra.mxu0 0.0
    %1330 = vmatprep.subr.mxu0 0.0
    %1331 = vmatpush1.xpose.msra.mxu0 0.0
    %1332 = vmatprep.subr.mxu0 0.0
    %1333 = vmatpush1.xpose.msra.mxu0 0.0
    %1334 = vmatprep.subr.mxu0 0.0
    %1335 = vmatpush1.xpose.msra.mxu0 0.0
    %1336 = vmatprep.subr.mxu0 0.0
    %1337 = vmatpush1.xpose.msra.mxu0 0.0
    %1338 = vmatprep.subr.mxu0 0.0
    %1339 = vmatpush1.xpose.msra.mxu0 0.0
    %1340 = vmatprep.subr.mxu0 0.0
    %1341 = vmatpush1.xpose.msra.mxu0 0.0
    %1342 = vmatprep.subr.mxu0 0.0
    %1343 = vmatpush1.xpose.msra.mxu0 0.0
    %1344 = vmatprep.subr.mxu0 0.0
    %1345 = vmatpush1.xpose.msra.mxu0 0.0
    %1346 = vmatprep.subr.mxu0 0.0
    %1347 = vmatpush1.xpose.msra.mxu0 0.0
    %1348 = vmatprep.subr.mxu0 0.0
    %1349 = vmatpush1.xpose.msra.mxu0 0.0
    %1350 = vmatprep.subr.mxu0 0.0
    %1351 = vmatpush1.xpose.msra.mxu0 0.0
    %1352 = vmatprep.subr.mxu0 0.0
    %1353 = vmatpush1.xpose.msra.mxu0 0.0
    %1354 = vmatprep.mubr.f32.mxu0 0.0
    %1355 = vmatmul.mubr.f32.gmra.mrb[0].mxu0 %v1286
    %v1356 = vpop.f32.mrb[0].mxu0
    %v1357 = vadd.f32 0.0, %v1356
    %v1358 = vpop.f32.mrb[0].mxu0
    %1359 = vdwg.mxu0
    %1360 = vrot.lane.b32.xlu0 %v272, 112
    %v1361 = vpop.permute.xlu0 %1360
    %1362 = vrot.lane.b32.xlu0 %v366, 112
    %v1363 = vpop.permute.xlu0 %1362
    %v1364 = vsel %vm467, %v1361, 0
    %v1366 = vsel %vm467, %v1363, 0
    %1368 = vmatprep.subr.mxu0 0.0
    %1369 = vmatpush1.xpose.msra.mxu0 %v1366
    %1370 = vmatprep.subr.mxu0 0.0
    %1371 = vmatpush1.xpose.msra.mxu0 0.0
    %1372 = vmatprep.subr.mxu0 0.0
    %1373 = vmatpush1.xpose.msra.mxu0 0.0
    %1374 = vmatprep.subr.mxu0 0.0
    %1375 = vmatpush1.xpose.msra.mxu0 0.0
    %1376 = vmatprep.subr.mxu0 0.0
    %1377 = vmatpush1.xpose.msra.mxu0 0.0
    %1378 = vmatprep.subr.mxu0 0.0
    %1379 = vmatpush1.xpose.msra.mxu0 0.0
    %1380 = vmatprep.subr.mxu0 0.0
    %1381 = vmatpush1.xpose.msra.mxu0 0.0
    %1382 = vmatprep.subr.mxu0 0.0
    %1383 = vmatpush1.xpose.msra.mxu0 0.0
    %1384 = vmatprep.subr.mxu0 0.0
    %1385 = vmatpush1.xpose.msra.mxu0 0.0
    %1386 = vmatprep.subr.mxu0 0.0
    %1387 = vmatpush1.xpose.msra.mxu0 0.0
    %1388 = vmatprep.subr.mxu0 0.0
    %1389 = vmatpush1.xpose.msra.mxu0 0.0
    %1390 = vmatprep.subr.mxu0 0.0
    %1391 = vmatpush1.xpose.msra.mxu0 0.0
    %1392 = vmatprep.subr.mxu0 0.0
    %1393 = vmatpush1.xpose.msra.mxu0 0.0
    %1394 = vmatprep.subr.mxu0 0.0
    %1395 = vmatpush1.xpose.msra.mxu0 0.0
    %1396 = vmatprep.subr.mxu0 0.0
    %1397 = vmatpush1.xpose.msra.mxu0 0.0
    %1398 = vmatprep.subr.mxu0 0.0
    %1399 = vmatpush1.xpose.msra.mxu0 0.0
    %1400 = vmatprep.subr.mxu0 0.0
    %1401 = vmatpush1.xpose.msra.mxu0 0.0
    %1402 = vmatprep.subr.mxu0 0.0
    %1403 = vmatpush1.xpose.msra.mxu0 0.0
    %1404 = vmatprep.subr.mxu0 0.0
    %1405 = vmatpush1.xpose.msra.mxu0 0.0
    %1406 = vmatprep.subr.mxu0 0.0
    %1407 = vmatpush1.xpose.msra.mxu0 0.0
    %1408 = vmatprep.subr.mxu0 0.0
    %1409 = vmatpush1.xpose.msra.mxu0 0.0
    %1410 = vmatprep.subr.mxu0 0.0
    %1411 = vmatpush1.xpose.msra.mxu0 0.0
    %1412 = vmatprep.subr.mxu0 0.0
    %1413 = vmatpush1.xpose.msra.mxu0 0.0
    %1414 = vmatprep.subr.mxu0 0.0
    %1415 = vmatpush1.xpose.msra.mxu0 0.0
    %1416 = vmatprep.subr.mxu0 0.0
    %1417 = vmatpush1.xpose.msra.mxu0 0.0
    %1418 = vmatprep.subr.mxu0 0.0
    %1419 = vmatpush1.xpose.msra.mxu0 0.0
    %1420 = vmatprep.subr.mxu0 0.0
    %1421 = vmatpush1.xpose.msra.mxu0 0.0
    %1422 = vmatprep.subr.mxu0 0.0
    %1423 = vmatpush1.xpose.msra.mxu0 0.0
    %1424 = vmatprep.subr.mxu0 0.0
    %1425 = vmatpush1.xpose.msra.mxu0 0.0
    %1426 = vmatprep.subr.mxu0 0.0
    %1427 = vmatpush1.xpose.msra.mxu0 0.0
    %1428 = vmatprep.subr.mxu0 0.0
    %1429 = vmatpush1.xpose.msra.mxu0 0.0
    %1430 = vmatprep.subr.mxu0 0.0
    %1431 = vmatpush1.xpose.msra.mxu0 0.0
    %1432 = vmatprep.mubr.f32.mxu0 0.0
    %1433 = vmatmul.mubr.f32.gmra.mrb[0].mxu0 %v1364
    %v1434 = vpop.f32.mrb[0].mxu0
    %v1435 = vadd.f32 0.0, %v1434
    %v1436 = vpop.f32.mrb[0].mxu0
    %1437 = vdwg.mxu0
    %v1438 = vsel %vm467, %v1357, -inf
    %1439 = vmax.xlane.f32.xlu0 %v1438
    %v1440 = vpop.xlane.xlu0 %1439
    %v1441 = vsel %vm467, %v1435, -inf
    %1442 = vmax.xlane.f32.xlu0 %v1441
    %v1443 = vpop.xlane.xlu0 %1442
    %v1444 = vsub.f32 %v1357, %v1440
    %v1445 = vsub.f32 %v1435, %v1443
    %v1446 = vmul.f32 %v1444, 1.442695
    %v1447 = vpow.pop %v1446
    %v1448 = vmul.f32 %v1445, 1.442695
    %v1449 = vpow.pop %v1448
    %v1450 = vsel %vm467, %v1447, 0.0
    %1451 = vadd.xlane.f32.xlu0 %v1450
    %v1452 = vpop.xlane.xlu0 %1451
    %v1453 = vsel %vm467, %v1449, 0.0
    %1454 = vadd.xlane.f32.xlu0 %v1453
    %v1455 = vpop.xlane.xlu0 %1454
    %v1456 = vrcp.pop %v1452
    %v1457 = vrcp.pop %v1455
    %v1458 = vmul.f32 %v1447, %v1456
    %v1459 = vmul.f32 %v1449, %v1457
    %1460 = vrot.lane.b32.xlu0 %v455, 112
    %v1461 = vpop.permute.xlu0 %1460
    %v1464 = vsel %vm467, %v1458, 0
    %1466 = vmatprep.subr.mxu0 0.0
    %1467 = vmatpush1.msra.mxu0 %v1461
    %1468 = vmatprep.subr.mxu0 0.0
    %1469 = vmatpush1.msra.mxu0 0.0
    %1470 = vmatprep.subr.mxu0 0.0
    %1471 = vmatpush1.msra.mxu0 0.0
    %1472 = vmatprep.subr.mxu0 0.0
    %1473 = vmatpush1.msra.mxu0 0.0
    %1474 = vmatprep.subr.mxu0 0.0
    %1475 = vmatpush1.msra.mxu0 0.0
    %1476 = vmatprep.subr.mxu0 0.0
    %1477 = vmatpush1.msra.mxu0 0.0
    %1478 = vmatprep.subr.mxu0 0.0
    %1479 = vmatpush1.msra.mxu0 0.0
    %1480 = vmatprep.subr.mxu0 0.0
    %1481 = vmatpush1.msra.mxu0 0.0
    %1482 = vmatprep.subr.mxu0 0.0
    %1483 = vmatpush1.msra.mxu0 0.0
    %1484 = vmatprep.subr.mxu0 0.0
    %1485 = vmatpush1.msra.mxu0 0.0
    %1486 = vmatprep.subr.mxu0 0.0
    %1487 = vmatpush1.msra.mxu0 0.0
    %1488 = vmatprep.subr.mxu0 0.0
    %1489 = vmatpush1.msra.mxu0 0.0
    %1490 = vmatprep.subr.mxu0 0.0
    %1491 = vmatpush1.msra.mxu0 0.0
    %1492 = vmatprep.subr.mxu0 0.0
    %1493 = vmatpush1.msra.mxu0 0.0
    %1494 = vmatprep.subr.mxu0 0.0
    %1495 = vmatpush1.msra.mxu0 0.0
    %1496 = vmatprep.subr.mxu0 0.0
    %1497 = vmatpush1.msra.mxu0 0.0
    %1498 = vmatprep.subr.mxu0 0.0
    %1499 = vmatpush1.msra.mxu0 0.0
    %1500 = vmatprep.subr.mxu0 0.0
    %1501 = vmatpush1.msra.mxu0 0.0
    %1502 = vmatprep.subr.mxu0 0.0
    %1503 = vmatpush1.msra.mxu0 0.0
    %1504 = vmatprep.subr.mxu0 0.0
    %1505 = vmatpush1.msra.mxu0 0.0
    %1506 = vmatprep.subr.mxu0 0.0
    %1507 = vmatpush1.msra.mxu0 0.0
    %1508 = vmatprep.subr.mxu0 0.0
    %1509 = vmatpush1.msra.mxu0 0.0
    %1510 = vmatprep.subr.mxu0 0.0
    %1511 = vmatpush1.msra.mxu0 0.0
    %1512 = vmatprep.subr.mxu0 0.0
    %1513 = vmatpush1.msra.mxu0 0.0
    %1514 = vmatprep.subr.mxu0 0.0
    %1515 = vmatpush1.msra.mxu0 0.0
    %1516 = vmatprep.subr.mxu0 0.0
    %1517 = vmatpush1.msra.mxu0 0.0
    %1518 = vmatprep.subr.mxu0 0.0
    %1519 = vmatpush1.msra.mxu0 0.0
    %1520 = vmatprep.subr.mxu0 0.0
    %1521 = vmatpush1.msra.mxu0 0.0
    %1522 = vmatprep.subr.mxu0 0.0
    %1523 = vmatpush1.msra.mxu0 0.0
    %1524 = vmatprep.subr.mxu0 0.0
    %1525 = vmatpush1.msra.mxu0 0.0
    %1526 = vmatprep.subr.mxu0 0.0
    %1527 = vmatpush1.msra.mxu0 0.0
    %1528 = vmatprep.subr.mxu0 0.0
    %1529 = vmatpush1.msra.mxu0 0.0
    %1530 = vmatprep.mubr.f32.mxu0 0.0
    %1531 = vmatmul.mubr.f32.gmra.mrb[0].mxu0 %v1464
    %v1532 = vpop.f32.mrb[0].mxu0
    %v1533 = vadd.f32 0.0, %v1532
    %v1534 = vpop.f32.mrb[0].mxu0
    %1535 = vdwg.mxu0
    %1536 = vrot.lane.b32.xlu0 %v460, 112
    %v1537 = vpop.permute.xlu0 %1536
    %v1540 = vsel %vm467, %v1459, 0
    %1542 = vmatprep.subr.mxu0 0.0
    %1543 = vmatpush1.msra.mxu0 %v1537
    %1544 = vmatprep.subr.mxu0 0.0
    %1545 = vmatpush1.msra.mxu0 0.0
    %1546 = vmatprep.subr.mxu0 0.0
    %1547 = vmatpush1.msra.mxu0 0.0
    %1548 = vmatprep.subr.mxu0 0.0
    %1549 = vmatpush1.msra.mxu0 0.0
    %1550 = vmatprep.subr.mxu0 0.0
    %1551 = vmatpush1.msra.mxu0 0.0
    %1552 = vmatprep.subr.mxu0 0.0
    %1553 = vmatpush1.msra.mxu0 0.0
    %1554 = vmatprep.subr.mxu0 0.0
    %1555 = vmatpush1.msra.mxu0 0.0
    %1556 = vmatprep.subr.mxu0 0.0
    %1557 = vmatpush1.msra.mxu0 0.0
    %1558 = vmatprep.subr.mxu0 0.0
    %1559 = vmatpush1.msra.mxu0 0.0
    %1560 = vmatprep.subr.mxu0 0.0
    %1561 = vmatpush1.msra.mxu0 0.0
    %1562 = vmatprep.subr.mxu0 0.0
    %1563 = vmatpush1.msra.mxu0 0.0
    %1564 = vmatprep.subr.mxu0 0.0
    %1565 = vmatpush1.msra.mxu0 0.0
    %1566 = vmatprep.subr.mxu0 0.0
    %1567 = vmatpush1.msra.mxu0 0.0
    %1568 = vmatprep.subr.mxu0 0.0
    %1569 = vmatpush1.msra.mxu0 0.0
    %1570 = vmatprep.subr.mxu0 0.0
    %1571 = vmatpush1.msra.mxu0 0.0
    %1572 = vmatprep.subr.mxu0 0.0
    %1573 = vmatpush1.msra.mxu0 0.0
    %1574 = vmatprep.subr.mxu0 0.0
    %1575 = vmatpush1.msra.mxu0 0.0
    %1576 = vmatprep.subr.mxu0 0.0
    %1577 = vmatpush1.msra.mxu0 0.0
    %1578 = vmatprep.subr.mxu0 0.0
    %1579 = vmatpush1.msra.mxu0 0.0
    %1580 = vmatprep.subr.mxu0 0.0
    %1581 = vmatpush1.msra.mxu0 0.0
    %1582 = vmatprep.subr.mxu0 0.0
    %1583 = vmatpush1.msra.mxu0 0.0
    %1584 = vmatprep.subr.mxu0 0.0
    %1585 = vmatpush1.msra.mxu0 0.0
    %1586 = vmatprep.subr.mxu0 0.0
    %1587 = vmatpush1.msra.mxu0 0.0
    %1588 = vmatprep.subr.mxu0 0.0
    %1589 = vmatpush1.msra.mxu0 0.0
    %1590 = vmatprep.subr.mxu0 0.0
    %1591 = vmatpush1.msra.mxu0 0.0
    %1592 = vmatprep.subr.mxu0 0.0
    %1593 = vmatpush1.msra.mxu0 0.0
    %1594 = vmatprep.subr.mxu0 0.0
    %1595 = vmatpush1.msra.mxu0 0.0
    %1596 = vmatprep.subr.mxu0 0.0
    %1597 = vmatpush1.msra.mxu0 0.0
    %1598 = vmatprep.subr.mxu0 0.0
    %1599 = vmatpush1.msra.mxu0 0.0
    %1600 = vmatprep.subr.mxu0 0.0
    %1601 = vmatpush1.msra.mxu0 0.0
    %1602 = vmatprep.subr.mxu0 0.0
    %1603 = vmatpush1.msra.mxu0 0.0
    %1604 = vmatprep.subr.mxu0 0.0
    %1605 = vmatpush1.msra.mxu0 0.0
    %1606 = vmatprep.mubr.f32.mxu0 0.0
    %1607 = vmatmul.mubr.f32.gmra.mrb[0].mxu0 %v1540
    %v1608 = vpop.f32.mrb[0].mxu0
    %v1609 = vadd.f32 0.0, %v1608
    %v1610 = vpop.f32.mrb[0].mxu0
    %1611 = vdwg.mxu0
    %v1613 = vsel %vm467, %v1533, 0
    %v1616 = vsel %vm467, %v1609, 0
    %1618 = vmatprep.subr.mxu0 0.0
    %1619 = vmatpush1.msra.mxu0 %v465
    %1620 = vmatprep.subr.mxu0 0.0
    %1621 = vmatpush1.msra.mxu0 0.0
    %1622 = vmatprep.subr.mxu0 0.0
    %1623 = vmatpush1.msra.mxu0 0.0
    %1624 = vmatprep.subr.mxu0 0.0
    %1625 = vmatpush1.msra.mxu0 0.0
    %1626 = vmatprep.subr.mxu0 0.0
    %1627 = vmatpush1.msra.mxu0 0.0
    %1628 = vmatprep.subr.mxu0 0.0
    %1629 = vmatpush1.msra.mxu0 0.0
    %1630 = vmatprep.subr.mxu0 0.0
    %1631 = vmatpush1.msra.mxu0 0.0
    %1632 = vmatprep.subr.mxu0 0.0
    %1633 = vmatpush1.msra.mxu0 0.0
    %1634 = vmatprep.subr.mxu0 0.0
    %1635 = vmatpush1.msra.mxu0 0.0
    %1636 = vmatprep.subr.mxu0 0.0
    %1637 = vmatpush1.msra.mxu0 0.0
    %1638 = vmatprep.subr.mxu0 0.0
    %1639 = vmatpush1.msra.mxu0 0.0
    %1640 = vmatprep.subr.mxu0 0.0
    %1641 = vmatpush1.msra.mxu0 0.0
    %1642 = vmatprep.subr.mxu0 0.0
    %1643 = vmatpush1.msra.mxu0 0.0
    %1644 = vmatprep.subr.mxu0 0.0
    %1645 = vmatpush1.msra.mxu0 0.0
    %1646 = vmatprep.subr.mxu0 0.0
    %1647 = vmatpush1.msra.mxu0 0.0
    %1648 = vmatprep.subr.mxu0 0.0
    %1649 = vmatpush1.msra.mxu0 0.0
    %1650 = vmatprep.subr.mxu0 0.0
    %1651 = vmatpush1.msra.mxu0 0.0
    %1652 = vmatprep.subr.mxu0 0.0
    %1653 = vmatpush1.msra.mxu0 0.0
    %1654 = vmatprep.subr.mxu0 0.0
    %1655 = vmatpush1.msra.mxu0 0.0
    %1656 = vmatprep.subr.mxu0 0.0
    %1657 = vmatpush1.msra.mxu0 0.0
    %1658 = vmatprep.subr.mxu0 0.0
    %1659 = vmatpush1.msra.mxu0 0.0
    %1660 = vmatprep.subr.mxu0 0.0
    %1661 = vmatpush1.msra.mxu0 0.0
    %1662 = vmatprep.subr.mxu0 0.0
    %1663 = vmatpush1.msra.mxu0 0.0
    %1664 = vmatprep.subr.mxu0 0.0
    %1665 = vmatpush1.msra.mxu0 0.0
    %1666 = vmatprep.subr.mxu0 0.0
    %1667 = vmatpush1.msra.mxu0 0.0
    %1668 = vmatprep.subr.mxu0 0.0
    %1669 = vmatpush1.msra.mxu0 0.0
    %1670 = vmatprep.subr.mxu0 0.0
    %1671 = vmatpush1.msra.mxu0 0.0
    %1672 = vmatprep.subr.mxu0 0.0
    %1673 = vmatpush1.msra.mxu0 0.0
    %1674 = vmatprep.subr.mxu0 0.0
    %1675 = vmatpush1.msra.mxu0 0.0
    %1676 = vmatprep.subr.mxu0 0.0
    %1677 = vmatpush1.msra.mxu0 0.0
    %1678 = vmatprep.subr.mxu0 0.0
    %1679 = vmatpush1.msra.mxu0 0.0
    %1680 = vmatprep.subr.mxu0 0.0
    %1681 = vmatpush1.msra.mxu0 0.0
    %1682 = vmatprep.mubr.f32.mxu0 0.0
    %1683 = vmatmul.mubr.f32.gmra.mrb[0].mxu0 %v1613
    %v1684 = vpop.f32.mrb[0].mxu0
    %v1685 = vadd.f32 0.0, %v1684
    %v1686 = vpop.f32.mrb[0].mxu0
    %1687 = vmatprep.mubr.f32.mxu0 0.0
    %1688 = vmatmul.mubr.f32.gmra.mrb[0].mxu0 %v1616
    %v1689 = vpop.f32.mrb[0].mxu0
    %v1690 = vadd.f32 0.0, %v1689
    %v1691 = vpop.f32.mrb[0].mxu0
    %1692 = vdwg.mxu0
    %v1693 = vadd.f32 %v1274, %v1685
    %v1694 = vadd.f32 %v1279, %v1690
    %1695 = vrot.lane.b32.xlu0 %v267, 104
    %v1696 = vpop.permute.xlu0 %1695
    %1697 = vrot.lane.b32.xlu0 %v361, 104
    %v1698 = vpop.permute.xlu0 %1697
    %v1699 = vsel %vm467, %v1696, 0
    %v1701 = vsel %vm467, %v1698, 0
    %1703 = vmatprep.subr.mxu0 0.0
    %1704 = vmatpush1.xpose.msra.mxu0 %v1701
    %1705 = vmatprep.subr.mxu0 0.0
    %1706 = vmatpush1.xpose.msra.mxu0 0.0
    %1707 = vmatprep.subr.mxu0 0.0
    %1708 = vmatpush1.xpose.msra.mxu0 0.0
    %1709 = vmatprep.subr.mxu0 0.0
    %1710 = vmatpush1.xpose.msra.mxu0 0.0
    %1711 = vmatprep.subr.mxu0 0.0
    %1712 = vmatpush1.xpose.msra.mxu0 0.0
    %1713 = vmatprep.subr.mxu0 0.0
    %1714 = vmatpush1.xpose.msra.mxu0 0.0
    %1715 = vmatprep.subr.mxu0 0.0
    %1716 = vmatpush1.xpose.msra.mxu0 0.0
    %1717 = vmatprep.subr.mxu0 0.0
    %1718 = vmatpush1.xpose.msra.mxu0 0.0
    %1719 = vmatprep.subr.mxu0 0.0
    %1720 = vmatpush1.xpose.msra.mxu0 0.0
    %1721 = vmatprep.subr.mxu0 0.0
    %1722 = vmatpush1.xpose.msra.mxu0 0.0
    %1723 = vmatprep.subr.mxu0 0.0
    %1724 = vmatpush1.xpose.msra.mxu0 0.0
    %1725 = vmatprep.subr.mxu0 0.0
    %1726 = vmatpush1.xpose.msra.mxu0 0.0
    %1727 = vmatprep.subr.mxu0 0.0
    %1728 = vmatpush1.xpose.msra.mxu0 0.0
    %1729 = vmatprep.subr.mxu0 0.0
    %1730 = vmatpush1.xpose.msra.mxu0 0.0
    %1731 = vmatprep.subr.mxu0 0.0
    %1732 = vmatpush1.xpose.msra.mxu0 0.0
    %1733 = vmatprep.subr.mxu0 0.0
    %1734 = vmatpush1.xpose.msra.mxu0 0.0
    %1735 = vmatprep.subr.mxu0 0.0
    %1736 = vmatpush1.xpose.msra.mxu0 0.0
    %1737 = vmatprep.subr.mxu0 0.0
    %1738 = vmatpush1.xpose.msra.mxu0 0.0
    %1739 = vmatprep.subr.mxu0 0.0
    %1740 = vmatpush1.xpose.msra.mxu0 0.0
    %1741 = vmatprep.subr.mxu0 0.0
    %1742 = vmatpush1.xpose.msra.mxu0 0.0
    %1743 = vmatprep.subr.mxu0 0.0
    %1744 = vmatpush1.xpose.msra.mxu0 0.0
    %1745 = vmatprep.subr.mxu0 0.0
    %1746 = vmatpush1.xpose.msra.mxu0 0.0
    %1747 = vmatprep.subr.mxu0 0.0
    %1748 = vmatpush1.xpose.msra.mxu0 0.0
    %1749 = vmatprep.subr.mxu0 0.0
    %1750 = vmatpush1.xpose.msra.mxu0 0.0
    %1751 = vmatprep.subr.mxu0 0.0
    %1752 = vmatpush1.xpose.msra.mxu0 0.0
    %1753 = vmatprep.subr.mxu0 0.0
    %1754 = vmatpush1.xpose.msra.mxu0 0.0
    %1755 = vmatprep.subr.mxu0 0.0
    %1756 = vmatpush1.xpose.msra.mxu0 0.0
    %1757 = vmatprep.subr.mxu0 0.0
    %1758 = vmatpush1.xpose.msra.mxu0 0.0
    %1759 = vmatprep.subr.mxu0 0.0
    %1760 = vmatpush1.xpose.msra.mxu0 0.0
    %1761 = vmatprep.subr.mxu0 0.0
    %1762 = vmatpush1.xpose.msra.mxu0 0.0
    %1763 = vmatprep.subr.mxu0 0.0
    %1764 = vmatpush1.xpose.msra.mxu0 0.0
    %1765 = vmatprep.subr.mxu0 0.0
    %1766 = vmatpush1.xpose.msra.mxu0 0.0
    %1767 = vmatprep.mubr.f32.mxu0 0.0
    %1768 = vmatmul.mubr.f32.gmra.mrb[0].mxu0 %v1699
    %v1769 = vpop.f32.mrb[0].mxu0
    %v1770 = vadd.f32 0.0, %v1769
    %v1771 = vpop.f32.mrb[0].mxu0
    %1772 = vdwg.mxu0
    %1773 = vrot.lane.b32.xlu0 %v272, 104
    %v1774 = vpop.permute.xlu0 %1773
    %1775 = vrot.lane.b32.xlu0 %v366, 104
    %v1776 = vpop.permute.xlu0 %1775
    %v1777 = vsel %vm467, %v1774, 0
    %v1779 = vsel %vm467, %v1776, 0
    %1781 = vmatprep.subr.mxu0 0.0
    %1782 = vmatpush1.xpose.msra.mxu0 %v1779
    %1783 = vmatprep.subr.mxu0 0.0
    %1784 = vmatpush1.xpose.msra.mxu0 0.0
    %1785 = vmatprep.subr.mxu0 0.0
    %1786 = vmatpush1.xpose.msra.mxu0 0.0
    %1787 = vmatprep.subr.mxu0 0.0
    %1788 = vmatpush1.xpose.msra.mxu0 0.0
    %1789 = vmatprep.subr.mxu0 0.0
    %1790 = vmatpush1.xpose.msra.mxu0 0.0
    %1791 = vmatprep.subr.mxu0 0.0
    %1792 = vmatpush1.xpose.msra.mxu0 0.0
    %1793 = vmatprep.subr.mxu0 0.0
    %1794 = vmatpush1.xpose.msra.mxu0 0.0
    %1795 = vmatprep.subr.mxu0 0.0
    %1796 = vmatpush1.xpose.msra.mxu0 0.0
    %1797 = vmatprep.subr.mxu0 0.0
    %1798 = vmatpush1.xpose.msra.mxu0 0.0
    %1799 = vmatprep.subr.mxu0 0.0
    %1800 = vmatpush1.xpose.msra.mxu0 0.0
    %1801 = vmatprep.subr.mxu0 0.0
    %1802 = vmatpush1.xpose.msra.mxu0 0.0
    %1803 = vmatprep.subr.mxu0 0.0
    %1804 = vmatpush1.xpose.msra.mxu0 0.0
    %1805 = vmatprep.subr.mxu0 0.0
    %1806 = vmatpush1.xpose.msra.mxu0 0.0
    %1807 = vmatprep.subr.mxu0 0.0
    %1808 = vmatpush1.xpose.msra.mxu0 0.0
    %1809 = vmatprep.subr.mxu0 0.0
    %1810 = vmatpush1.xpose.msra.mxu0 0.0
    %1811 = vmatprep.subr.mxu0 0.0
    %1812 = vmatpush1.xpose.msra.mxu0 0.0
    %1813 = vmatprep.subr.mxu0 0.0
    %1814 = vmatpush1.xpose.msra.mxu0 0.0
    %1815 = vmatprep.subr.mxu0 0.0
    %1816 = vmatpush1.xpose.msra.mxu0 0.0
    %1817 = vmatprep.subr.mxu0 0.0
    %1818 = vmatpush1.xpose.msra.mxu0 0.0
    %1819 = vmatprep.subr.mxu0 0.0
    %1820 = vmatpush1.xpose.msra.mxu0 0.0
    %1821 = vmatprep.subr.mxu0 0.0
    %1822 = vmatpush1.xpose.msra.mxu0 0.0
    %1823 = vmatprep.subr.mxu0 0.0
    %1824 = vmatpush1.xpose.msra.mxu0 0.0
    %1825 = vmatprep.subr.mxu0 0.0
    %1826 = vmatpush1.xpose.msra.mxu0 0.0
    %1827 = vmatprep.subr.mxu0 0.0
    %1828 = vmatpush1.xpose.msra.mxu0 0.0
    %1829 = vmatprep.subr.mxu0 0.0
    %1830 = vmatpush1.xpose.msra.mxu0 0.0
    %1831 = vmatprep.subr.mxu0 0.0
    %1832 = vmatpush1.xpose.msra.mxu0 0.0
    %1833 = vmatprep.subr.mxu0 0.0
    %1834 = vmatpush1.xpose.msra.mxu0 0.0
    %1835 = vmatprep.subr.mxu0 0.0
    %1836 = vmatpush1.xpose.msra.mxu0 0.0
    %1837 = vmatprep.subr.mxu0 0.0
    %1838 = vmatpush1.xpose.msra.mxu0 0.0
    %1839 = vmatprep.subr.mxu0 0.0
    %1840 = vmatpush1.xpose.msra.mxu0 0.0
    %1841 = vmatprep.subr.mxu0 0.0
    %1842 = vmatpush1.xpose.msra.mxu0 0.0
    %1843 = vmatprep.subr.mxu0 0.0
    %1844 = vmatpush1.xpose.msra.mxu0 0.0
    %1845 = vmatprep.mubr.f32.mxu0 0.0
    %1846 = vmatmul.mubr.f32.gmra.mrb[0].mxu0 %v1777
    %v1847 = vpop.f32.mrb[0].mxu0
    %v1848 = vadd.f32 0.0, %v1847
    %v1849 = vpop.f32.mrb[0].mxu0
    %1850 = vdwg.mxu0
    %v1851 = vsel %vm467, %v1770, -inf
    %1852 = vmax.xlane.f32.xlu0 %v1851
    %v1853 = vpop.xlane.xlu0 %1852
    %v1854 = vsel %vm467, %v1848, -inf
    %1855 = vmax.xlane.f32.xlu0 %v1854
    %v1856 = vpop.xlane.xlu0 %1855
    %v1857 = vsub.f32 %v1770, %v1853
    %v1858 = vsub.f32 %v1848, %v1856
    %v1859 = vmul.f32 %v1857, 1.442695
    %v1860 = vpow.pop %v1859
    %v1861 = vmul.f32 %v1858, 1.442695
    %v1862 = vpow.pop %v1861
    %v1863 = vsel %vm467, %v1860, 0.0
    %1864 = vadd.xlane.f32.xlu0 %v1863
    %v1865 = vpop.xlane.xlu0 %1864
    %v1866 = vsel %vm467, %v1862, 0.0
    %1867 = vadd.xlane.f32.xlu0 %v1866
    %v1868 = vpop.xlane.xlu0 %1867
    %v1869 = vrcp.pop %v1865
    %v1870 = vrcp.pop %v1868
    %v1871 = vmul.f32 %v1860, %v1869
    %v1872 = vmul.f32 %v1862, %v1870
    %1873 = vrot.lane.b32.xlu0 %v455, 104
    %v1874 = vpop.permute.xlu0 %1873
    %v1877 = vsel %vm467, %v1871, 0
    %1879 = vmatprep.subr.mxu0 0.0
    %1880 = vmatpush1.msra.mxu0 %v1874
    %1881 = vmatprep.subr.mxu0 0.0
    %1882 = vmatpush1.msra.mxu0 0.0
    %1883 = vmatprep.subr.mxu0 0.0
    %1884 = vmatpush1.msra.mxu0 0.0
    %1885 = vmatprep.subr.mxu0 0.0
    %1886 = vmatpush1.msra.mxu0 0.0
    %1887 = vmatprep.subr.mxu0 0.0
    %1888 = vmatpush1.msra.mxu0 0.0
    %1889 = vmatprep.subr.mxu0 0.0
    %1890 = vmatpush1.msra.mxu0 0.0
    %1891 = vmatprep.subr.mxu0 0.0
    %1892 = vmatpush1.msra.mxu0 0.0
    %1893 = vmatprep.subr.mxu0 0.0
    %1894 = vmatpush1.msra.mxu0 0.0
    %1895 = vmatprep.subr.mxu0 0.0
    %1896 = vmatpush1.msra.mxu0 0.0
    %1897 = vmatprep.subr.mxu0 0.0
    %1898 = vmatpush1.msra.mxu0 0.0
    %1899 = vmatprep.subr.mxu0 0.0
    %1900 = vmatpush1.msra.mxu0 0.0
    %1901 = vmatprep.subr.mxu0 0.0
    %1902 = vmatpush1.msra.mxu0 0.0
    %1903 = vmatprep.subr.mxu0 0.0
    %1904 = vmatpush1.msra.mxu0 0.0
    %1905 = vmatprep.subr.mxu0 0.0
    %1906 = vmatpush1.msra.mxu0 0.0
    %1907 = vmatprep.subr.mxu0 0.0
    %1908 = vmatpush1.msra.mxu0 0.0
    %1909 = vmatprep.subr.mxu0 0.0
    %1910 = vmatpush1.msra.mxu0 0.0
    %1911 = vmatprep.subr.mxu0 0.0
    %1912 = vmatpush1.msra.mxu0 0.0
    %1913 = vmatprep.subr.mxu0 0.0
    %1914 = vmatpush1.msra.mxu0 0.0
    %1915 = vmatprep.subr.mxu0 0.0
    %1916 = vmatpush1.msra.mxu0 0.0
    %1917 = vmatprep.subr.mxu0 0.0
    %1918 = vmatpush1.msra.mxu0 0.0
    %1919 = vmatprep.subr.mxu0 0.0
    %1920 = vmatpush1.msra.mxu0 0.0
    %1921 = vmatprep.subr.mxu0 0.0
    %1922 = vmatpush1.msra.mxu0 0.0
    %1923 = vmatprep.subr.mxu0 0.0
    %1924 = vmatpush1.msra.mxu0 0.0
    %1925 = vmatprep.subr.mxu0 0.0
    %1926 = vmatpush1.msra.mxu0 0.0
    %1927 = vmatprep.subr.mxu0 0.0
    %1928 = vmatpush1.msra.mxu0 0.0
    %1929 = vmatprep.subr.mxu0 0.0
    %1930 = vmatpush1.msra.mxu0 0.0
    %1931 = vmatprep.subr.mxu0 0.0
    %1932 = vmatpush1.msra.mxu0 0.0
    %1933 = vmatprep.subr.mxu0 0.0
    %1934 = vmatpush1.msra.mxu0 0.0
    %1935 = vmatprep.subr.mxu0 0.0
    %1936 = vmatpush1.msra.mxu0 0.0
    %1937 = vmatprep.subr.mxu0 0.0
    %1938 = vmatpush1.msra.mxu0 0.0
    %1939 = vmatprep.subr.mxu0 0.0
    %1940 = vmatpush1.msra.mxu0 0.0
    %1941 = vmatprep.subr.mxu0 0.0
    %1942 = vmatpush1.msra.mxu0 0.0
    %1943 = vmatprep.mubr.f32.mxu0 0.0
    %1944 = vmatmul.mubr.f32.gmra.mrb[0].mxu0 %v1877
    %v1945 = vpop.f32.mrb[0].mxu0
    %v1946 = vadd.f32 0.0, %v1945
    %v1947 = vpop.f32.mrb[0].mxu0
    %1948 = vdwg.mxu0
    %1949 = vrot.lane.b32.xlu0 %v460, 104
    %v1950 = vpop.permute.xlu0 %1949
    %v1953 = vsel %vm467, %v1872, 0
    %1955 = vmatprep.subr.mxu0 0.0
    %1956 = vmatpush1.msra.mxu0 %v1950
    %1957 = vmatprep.subr.mxu0 0.0
    %1958 = vmatpush1.msra.mxu0 0.0
    %1959 = vmatprep.subr.mxu0 0.0
    %1960 = vmatpush1.msra.mxu0 0.0
    %1961 = vmatprep.subr.mxu0 0.0
    %1962 = vmatpush1.msra.mxu0 0.0
    %1963 = vmatprep.subr.mxu0 0.0
    %1964 = vmatpush1.msra.mxu0 0.0
    %1965 = vmatprep.subr.mxu0 0.0
    %1966 = vmatpush1.msra.mxu0 0.0
    %1967 = vmatprep.subr.mxu0 0.0
    %1968 = vmatpush1.msra.mxu0 0.0
    %1969 = vmatprep.subr.mxu0 0.0
    %1970 = vmatpush1.msra.mxu0 0.0
    %1971 = vmatprep.subr.mxu0 0.0
    %1972 = vmatpush1.msra.mxu0 0.0
    %1973 = vmatprep.subr.mxu0 0.0
    %1974 = vmatpush1.msra.mxu0 0.0
    %1975 = vmatprep.subr.mxu0 0.0
    %1976 = vmatpush1.msra.mxu0 0.0
    %1977 = vmatprep.subr.mxu0 0.0
    %1978 = vmatpush1.msra.mxu0 0.0
    %1979 = vmatprep.subr.mxu0 0.0
    %1980 = vmatpush1.msra.mxu0 0.0
    %1981 = vmatprep.subr.mxu0 0.0
    %1982 = vmatpush1.msra.mxu0 0.0
    %1983 = vmatprep.subr.mxu0 0.0
    %1984 = vmatpush1.msra.mxu0 0.0
    %1985 = vmatprep.subr.mxu0 0.0
    %1986 = vmatpush1.msra.mxu0 0.0
    %1987 = vmatprep.subr.mxu0 0.0
    %1988 = vmatpush1.msra.mxu0 0.0
    %1989 = vmatprep.subr.mxu0 0.0
    %1990 = vmatpush1.msra.mxu0 0.0
    %1991 = vmatprep.subr.mxu0 0.0
    %1992 = vmatpush1.msra.mxu0 0.0
    %1993 = vmatprep.subr.mxu0 0.0
    %1994 = vmatpush1.msra.mxu0 0.0
    %1995 = vmatprep.subr.mxu0 0.0
    %1996 = vmatpush1.msra.mxu0 0.0
    %1997 = vmatprep.subr.mxu0 0.0
    %1998 = vmatpush1.msra.mxu0 0.0
    %1999 = vmatprep.subr.mxu0 0.0
    %2000 = vmatpush1.msra.mxu0 0.0
    %2001 = vmatprep.subr.mxu0 0.0
    %2002 = vmatpush1.msra.mxu0 0.0
    %2003 = vmatprep.subr.mxu0 0.0
    %2004 = vmatpush1.msra.mxu0 0.0
    %2005 = vmatprep.subr.mxu0 0.0
    %2006 = vmatpush1.msra.mxu0 0.0
    %2007 = vmatprep.subr.mxu0 0.0
    %2008 = vmatpush1.msra.mxu0 0.0
    %2009 = vmatprep.subr.mxu0 0.0
    %2010 = vmatpush1.msra.mxu0 0.0
    %2011 = vmatprep.subr.mxu0 0.0
    %2012 = vmatpush1.msra.mxu0 0.0
    %2013 = vmatprep.subr.mxu0 0.0
    %2014 = vmatpush1.msra.mxu0 0.0
    %2015 = vmatprep.subr.mxu0 0.0
    %2016 = vmatpush1.msra.mxu0 0.0
    %2017 = vmatprep.subr.mxu0 0.0
    %2018 = vmatpush1.msra.mxu0 0.0
    %2019 = vmatprep.mubr.f32.mxu0 0.0
    %2020 = vmatmul.mubr.f32.gmra.mrb[0].mxu0 %v1953
    %v2021 = vpop.f32.mrb[0].mxu0
    %v2022 = vadd.f32 0.0, %v2021
    %v2023 = vpop.f32.mrb[0].mxu0
    %2024 = vdwg.mxu0
    %v2026 = vsel %vm467, %v1946, 0
    %v2029 = vsel %vm467, %v2022, 0
    %2031 = vmatprep.subr.mxu0 0.0
    %2032 = vmatpush1.msra.mxu0 %v466
    %2033 = vmatprep.subr.mxu0 0.0
    %2034 = vmatpush1.msra.mxu0 0.0
    %2035 = vmatprep.subr.mxu0 0.0
    %2036 = vmatpush1.msra.mxu0 0.0
    %2037 = vmatprep.subr.mxu0 0.0
    %2038 = vmatpush1.msra.mxu0 0.0
    %2039 = vmatprep.subr.mxu0 0.0
    %2040 = vmatpush1.msra.mxu0 0.0
    %2041 = vmatprep.subr.mxu0 0.0
    %2042 = vmatpush1.msra.mxu0 0.0
    %2043 = vmatprep.subr.mxu0 0.0
    %2044 = vmatpush1.msra.mxu0 0.0
    %2045 = vmatprep.subr.mxu0 0.0
    %2046 = vmatpush1.msra.mxu0 0.0
    %2047 = vmatprep.subr.mxu0 0.0
    %2048 = vmatpush1.msra.mxu0 0.0
    %2049 = vmatprep.subr.mxu0 0.0
    %2050 = vmatpush1.msra.mxu0 0.0
    %2051 = vmatprep.subr.mxu0 0.0
    %2052 = vmatpush1.msra.mxu0 0.0
    %2053 = vmatprep.subr.mxu0 0.0
    %2054 = vmatpush1.msra.mxu0 0.0
    %2055 = vmatprep.subr.mxu0 0.0
    %2056 = vmatpush1.msra.mxu0 0.0
    %2057 = vmatprep.subr.mxu0 0.0
    %2058 = vmatpush1.msra.mxu0 0.0
    %2059 = vmatprep.subr.mxu0 0.0
    %2060 = vmatpush1.msra.mxu0 0.0
    %2061 = vmatprep.subr.mxu0 0.0
    %2062 = vmatpush1.msra.mxu0 0.0
    %2063 = vmatprep.subr.mxu0 0.0
    %2064 = vmatpush1.msra.mxu0 0.0
    %2065 = vmatprep.subr.mxu0 0.0
    %2066 = vmatpush1.msra.mxu0 0.0
    %2067 = vmatprep.subr.mxu0 0.0
    %2068 = vmatpush1.msra.mxu0 0.0
    %2069 = vmatprep.subr.mxu0 0.0
    %2070 = vmatpush1.msra.mxu0 0.0
    %2071 = vmatprep.subr.mxu0 0.0
    %2072 = vmatpush1.msra.mxu0 0.0
    %2073 = vmatprep.subr.mxu0 0.0
    %2074 = vmatpush1.msra.mxu0 0.0
    %2075 = vmatprep.subr.mxu0 0.0
    %2076 = vmatpush1.msra.mxu0 0.0
    %2077 = vmatprep.subr.mxu0 0.0
    %2078 = vmatpush1.msra.mxu0 0.0
    %2079 = vmatprep.subr.mxu0 0.0
    %2080 = vmatpush1.msra.mxu0 0.0
    %2081 = vmatprep.subr.mxu0 0.0
    %2082 = vmatpush1.msra.mxu0 0.0
    %2083 = vmatprep.subr.mxu0 0.0
    %2084 = vmatpush1.msra.mxu0 0.0
    %2085 = vmatprep.subr.mxu0 0.0
    %2086 = vmatpush1.msra.mxu0 0.0
    %2087 = vmatprep.subr.mxu0 0.0
    %2088 = vmatpush1.msra.mxu0 0.0
    %2089 = vmatprep.subr.mxu0 0.0
    %2090 = vmatpush1.msra.mxu0 0.0
    %2091 = vmatprep.subr.mxu0 0.0
    %2092 = vmatpush1.msra.mxu0 0.0
    %2093 = vmatprep.subr.mxu0 0.0
    %2094 = vmatpush1.msra.mxu0 0.0
    %2095 = vmatprep.mubr.f32.mxu0 0.0
    %2096 = vmatmul.mubr.f32.gmra.mrb[0].mxu0 %v2026
    %v2097 = vpop.f32.mrb[0].mxu0
    %v2098 = vadd.f32 0.0, %v2097
    %v2099 = vpop.f32.mrb[0].mxu0
    %2100 = vmatprep.mubr.f32.mxu0 0.0
    %2101 = vmatmul.mubr.f32.gmra.mrb[0].mxu0 %v2029
    %v2102 = vpop.f32.mrb[0].mxu0
    %v2103 = vadd.f32 0.0, %v2102
    %v2104 = vpop.f32.mrb[0].mxu0
    %2105 = vdwg.mxu0
    %v2106 = vadd.f32 %v1693, %v2098
    %v2107 = vadd.f32 %v1694, %v2103
    %v2108 = vld [vmem:[#allocation19] sm:$0x1]
    %v2110 = vlaneseq
    %v2111 = vshrl.u32 %v2110, 7
    %v2112 = vsub.s32 0, %v2111
    %v2113 = vrot.slane %v2108, %v2112
    %v2115 = vadd.f32 %v2106, %v2113
    %v2116 = vadd.f32 %v2107, %v2113
    %2117 = vst.msk [vmem:[#allocation20] sm:$0xff] %vm193, %v2115
    %2118 = vst.msk [vmem:[#allocation20 + $0x8] sm:$0xff] %vm193, %v2116
    // Predicated region
    $region90: #{tpu_custom_call.1} parent=1 // pred_check
      _
    $region91: #{tpu_custom_call.1} parent=1 // pred_check_branch
      %2120 = sbr.rel (0) target = $region93
    $region92: #{tpu_custom_call.1} parent=1 // pred_region
      %s2122 = ssub.s32 256, 256
      %2123 = vsyncadd [#allocation4], %s2122
      %s2124 = sshll.u32 [#allocation20], 4
      %s2125 = int_to_ptr.vmem [resolvable:$true] %s2124
      %2130 = dma.vmem_to_hbm [thread:$0]  %s2125, 256, %s11, [#allocation4], 128, 128, 8
    $region93: #{tpu_custom_call.1} parent=1 // pred_fallthru
      _
    // Predicated region
    $region94: #{tpu_custom_call.1} parent=1 // pred_check
      _
    $region95: #{tpu_custom_call.1} parent=1 // pred_check_branch
      %2132 = sbr.rel (0) target = $region97
    $region96: #{tpu_custom_call.1} parent=1 // pred_region
      %2133 = dma.done [#allocation4], 256
    $region97: #{tpu_custom_call.1} parent=1 // pred_fallthru
      _
    %2134 = vsyncpa [#allocation3], 1
    %2135 = vsyncpa [#allocation6], 1
    %2136 = vsyncpa [#allocation9], 1
    %2137 = vsyncpa [#allocation12], 1
    %2138 = vsyncpa [#allocation15], 1
    %2139 = vsyncpa [#allocation18], 1
    %2140 = vsyncpa [#allocation4], 1

</llo_original>
